<compile_context>
chip_gen: v6e
topology: v6e:2x2x1
jax: 0.10.0
libtpu: 0.0.40
codegen_flags: <defaults>
</compile_context>

<pallas_src>
import functools

import jax
import jax.numpy as jnp
from jax import lax
from jax.experimental import pallas as pl
from jax.experimental.pallas import tpu as pltpu

BN_EPS = 1e-5
_VMEM_LIMIT = 32 * 1024 * 1024


# ----------------------------------------------------------------------------
# Fast path: whole tensor resident in VMEM, single fused kernel.
# ----------------------------------------------------------------------------
def fused_kernel(x_ref, wt_ref, gamma_ref, beta_ref, o_ref, y_scr, *, inv_m, eps):
    n = x_ref.shape[0]
    c_out = wt_ref.shape[0]
    hw = x_ref.shape[2]

    # Pass 1: per-image matmul into VMEM scratch + elementwise stat accumulation.
    s2 = jnp.zeros((c_out, hw), jnp.float32)
    q2 = jnp.zeros((c_out, hw), jnp.float32)
    for b in range(n):
        y = jnp.dot(wt_ref[...], x_ref[b], preferred_element_type=jnp.float32)
        y_scr[b] = y
        s2 = s2 + y
        q2 = q2 + y * y

    mean = jnp.sum(s2, axis=1, keepdims=True) * inv_m                  # (C, 1)
    var = jnp.maximum(jnp.sum(q2, axis=1, keepdims=True) * inv_m - mean * mean, 0.0)
    scale = gamma_ref[...] * lax.rsqrt(var + eps)                      # (C, 1)
    shift = beta_ref[...] - mean * scale                               # (C, 1)

    # Pass 2: normalize + ReLU straight into the NCHW output.
    for b in range(n):
        o_ref[b] = jnp.maximum(y_scr[b] * scale + shift, 0.0).astype(o_ref.dtype)


# ----------------------------------------------------------------------------
# Tiled path, phase 1: per-tile partial BN statistics (no y in HBM).
# ----------------------------------------------------------------------------
def stats_kernel(x_ref, wt_ref, stat_ref):
    tb = x_ref.shape[0]
    c_out = wt_ref.shape[0]
    hw = x_ref.shape[2]

    s2 = jnp.zeros((c_out, hw), jnp.float32)
    q2 = jnp.zeros((c_out, hw), jnp.float32)
    for b in range(tb):
        y = jnp.dot(wt_ref[...], x_ref[b], preferred_element_type=jnp.float32)
        s2 = s2 + y
        q2 = q2 + y * y

    stat_ref[0, :, 0:1] = jnp.sum(s2, axis=1, keepdims=True)   # per-channel sum
    stat_ref[0, :, 1:2] = jnp.sum(q2, axis=1, keepdims=True)   # per-channel sumsq


# ----------------------------------------------------------------------------
# Tiled path, phase 2: recompute matmul (scale folded into weight) + shift + ReLU.
# ----------------------------------------------------------------------------
def apply_kernel(x_ref, ws_ref, shift_ref, o_ref):
    tb = x_ref.shape[0]
    shift = shift_ref[...]                                      # (C, 1)
    for b in range(tb):
        y = jnp.dot(ws_ref[...], x_ref[b], preferred_element_type=jnp.float32)
        o_ref[b] = jnp.maximum(y + shift, 0.0).astype(o_ref.dtype)


@functools.partial(jax.jit, static_argnames=("fast_path_bytes", "tile_bytes"))
def model_forward(x_nchw, w_ct, gamma, beta, *,
                  fast_path_bytes=4 * 1024 * 1024,
                  tile_bytes=2 * 1024 * 1024):
    """x_nchw: (N, C, H, W); w_ct: (C_in, C_out) = ConvTranspose2d weight[:, :, 0, 0];
    gamma/beta: (C,)."""
    N, C, H, W = x_nchw.shape
    HW = H * W
    M = N * HW

    x = x_nchw.reshape(N, C, HW)                 # free reshape, stays NCHW
    wt = jnp.transpose(w_ct)                     # (C_out, C_in); tiny
    bytes_per_image = C * HW * 4
    tensor_bytes = N * bytes_per_image

    if tensor_bytes <= fast_path_bytes:
        gamma_c = gamma.reshape(C, 1).astype(jnp.float32)
        beta_c = beta.reshape(C, 1).astype(jnp.float32)
        out = pl.pallas_call(
            functools.partial(fused_kernel, inv_m=1.0 / M, eps=BN_EPS),
            out_shape=jax.ShapeDtypeStruct((N, C, HW), x_nchw.dtype),
            grid=(1,),
            in_specs=[
                pl.BlockSpec((N, C, HW), lambda i: (0, 0, 0)),
                pl.BlockSpec((C, C), lambda i: (0, 0)),
                pl.BlockSpec((C, 1), lambda i: (0, 0)),
                pl.BlockSpec((C, 1), lambda i: (0, 0)),
            ],
            out_specs=pl.BlockSpec((N, C, HW), lambda i: (0, 0, 0)),
            scratch_shapes=[pltpu.VMEM((N, C, HW), jnp.float32)],
            compiler_params=pltpu.CompilerParams(
                dimension_semantics=("arbitrary",),
                vmem_limit_bytes=_VMEM_LIMIT),
        )(x, wt, gamma_c, beta_c)
        return out.reshape(N, C, H, W)

    # ---------------- Tiled two-phase path ----------------
    tb_max = max(1, min(N, tile_bytes // bytes_per_image))
    divisors = [d for d in range(1, N + 1) if N % d == 0 and d <= tb_max]
    even_nb = [d for d in divisors if (N // d) % 2 == 0]     # v7x megacore balance
    tb = max(even_nb) if even_nb else max(divisors)
    nb = N // tb

    stats = pl.pallas_call(
        stats_kernel,
        out_shape=jax.ShapeDtypeStruct((nb, C, 2), jnp.float32),
        grid=(nb,),
        in_specs=[
            pl.BlockSpec((tb, C, HW), lambda i: (i, 0, 0)),
            pl.BlockSpec((C, C), lambda i: (0, 0)),          # weight resident
        ],
        out_specs=pl.BlockSpec((1, C, 2), lambda i: (i, 0, 0)),
        compiler_params=pltpu.CompilerParams(
            dimension_semantics=("parallel",),
            vmem_limit_bytes=_VMEM_LIMIT),
    )(x, wt)

    # Finalize batch statistics (tiny per-channel vectors) in plain JAX.
    s_tot = jnp.sum(stats[:, :, 0], axis=0)                  # (C,)
    q_tot = jnp.sum(stats[:, :, 1], axis=0)                  # (C,)
    mean = s_tot / M
    var = jnp.maximum(q_tot / M - mean * mean, 0.0)          # biased variance
    inv_std = lax.rsqrt(var + BN_EPS)
    scale = gamma.astype(jnp.float32) * inv_std              # (C,)
    shift = beta.astype(jnp.float32) - mean * scale          # (C,)
    w_scaled = wt * scale[:, None]                           # fold scale into W^T rows
    shift_col = shift[:, None]                               # (C, 1)

    out = pl.pallas_call(
        apply_kernel,
        out_shape=jax.ShapeDtypeStruct((N, C, HW), x_nchw.dtype),
        grid=(nb,),
        in_specs=[
            pl.BlockSpec((tb, C, HW), lambda i: (i, 0, 0)),
            pl.BlockSpec((C, C), lambda i: (0, 0)),          # scaled weight resident
            pl.BlockSpec((C, 1), lambda i: (0, 0)),          # shift resident
        ],
        out_specs=pl.BlockSpec((tb, C, HW), lambda i: (i, 0, 0)),
        compiler_params=pltpu.CompilerParams(
            dimension_semantics=("parallel",),
            vmem_limit_bytes=_VMEM_LIMIT),
    )(x, w_scaled, shift_col)
    return out.reshape(N, C, H, W)


def reference(x_nchw, w_ct, gamma, beta):
    """Pure-JAX reference of the PyTorch forward (training-mode BN)."""
    y = jnp.einsum("nchw,ck->nkhw", x_nchw, w_ct,
                   precision=lax.Precision.HIGHEST)
    mean = jnp.mean(y, axis=(0, 2, 3), keepdims=True)
    var = jnp.var(y, axis=(0, 2, 3), keepdims=True)          # biased
    yn = (y - mean) * lax.rsqrt(var + BN_EPS)
    yn = yn * gamma[None, :, None, None] + beta[None, :, None, None]
    return jnp.maximum(yn, 0.0)


if __name__ == "__main__":
    # Channels fixed at 225 by the module; small batch for a quick run.
    N, C, H, W = 2, 225, 8, 8

    key = jax.random.PRNGKey(0)
    kx, kw, kg, kb = jax.random.split(key, 4)

    x = jax.random.normal(kx, (N, C, H, W), dtype=jnp.float32)
    # ConvTranspose2d weight is (C_in, C_out, 1, 1); use its (C_in, C_out) slice.
    w_ct = jax.random.normal(kw, (C, C), dtype=jnp.float32) * 0.05
    gamma = 1.0 + 0.1 * jax.random.normal(kg, (C,), dtype=jnp.float32)
    beta = 0.1 * jax.random.normal(kb, (C,), dtype=jnp.float32)

    ref = reference(x, w_ct, gamma, beta)

    # Fast path: whole tensor resident in VMEM, single fused kernel.
    out_fast = model_forward(x, w_ct, gamma, beta)
    jax.block_until_ready(out_fast)

    # Tiled two-phase path (forced: one image per tile -> 2 parallel grid steps).
    out_tiled = model_forward(x, w_ct, gamma, beta,
                              fast_path_bytes=0, tile_bytes=C * H * W * 4)
    jax.block_until_ready(out_tiled)

    for out in (out_fast, out_tiled):
        assert out.shape == (N, C, H, W), out.shape
        assert bool(jnp.all(out >= 0.0)), "ReLU output should be non-negative"
        max_err = float(jnp.max(jnp.abs(out - ref)))
        assert bool(jnp.allclose(out, ref, rtol=2e-3, atol=2e-3)), max_err
    print("KERNEL_OK")
</pallas_src>

<mosaic_0001>
module attributes {stable_mosaic.version = 11 : i64} {
  func.func @fused_kernel(%arg0: i32, %arg1: memref<2x225x64xf32, #tpu.memory_space<vmem>>, %arg2: memref<225x225xf32, #tpu.memory_space<vmem>>, %arg3: memref<225x1xf32, #tpu.memory_space<vmem>>, %arg4: memref<225x1xf32, #tpu.memory_space<vmem>>, %arg5: memref<2x225x64xf32, #tpu.memory_space<vmem>>, %arg6: memref<2x225x64xf32, #tpu.memory_space<vmem>>) attributes {dimension_semantics = [#tpu.dimension_semantics<arbitrary>], iteration_bounds = array<i64: 1>, scalar_prefetch = 0 : i64, scratch_operands = 1 : i64, tpu.core_type = #tpu.core_type<tc>, window_params = [{pipeline_mode = #tpu.pipeline_mode<synchronous>, transform_indices = @transform_0, window_bounds = array<i64: 2, 225, 64>}, {pipeline_mode = #tpu.pipeline_mode<synchronous>, transform_indices = @transform_1, window_bounds = array<i64: 225, 225>}, {pipeline_mode = #tpu.pipeline_mode<synchronous>, transform_indices = @transform_2, window_bounds = array<i64: 225, 1>}, {pipeline_mode = #tpu.pipeline_mode<synchronous>, transform_indices = @transform_3, window_bounds = array<i64: 225, 1>}, {pipeline_mode = #tpu.pipeline_mode<synchronous>, transform_indices = @transform_4, window_bounds = array<i64: 2, 225, 64>}]} {
    %cst = arith.constant 0.000000e+00 : f32
    %0 = vector.broadcast %cst : f32 to vector<225x64xf32>
    %cst_0 = arith.constant 0.000000e+00 : f32
    %1 = vector.broadcast %cst_0 : f32 to vector<225x64xf32>
    %c0 = arith.constant 0 : index
    %c0_1 = arith.constant 0 : index
    %2 = vector.load %arg2[%c0, %c0_1] : memref<225x225xf32, #tpu.memory_space<vmem>>, vector<225x225xf32>
    %c0_2 = arith.constant 0 : index
    %c0_3 = arith.constant 0 : index
    %c0_4 = arith.constant 0 : index
    %3 = vector.load %arg1[%c0_2, %c0_3, %c0_4] : memref<2x225x64xf32, #tpu.memory_space<vmem>>, vector<1x225x64xf32>
    %4 = vector.shape_cast %3 : vector<1x225x64xf32> to vector<225x64xf32>
    %cst_5 = arith.constant dense<0.000000e+00> : vector<225x64xf32>
    %5 = tpu.matmul %2, %4, %cst_5 {dimension_numbers = #tpu.dot_dimension_numbers<[1], [0], [0], [1], [0, 0, 1, 1], [], []>} : vector<225x225xf32>, vector<225x64xf32>, vector<225x64xf32> -> vector<225x64xf32>
    %c0_6 = arith.constant 0 : index
    %c0_7 = arith.constant 0 : index
    %c0_8 = arith.constant 0 : index
    %6 = vector.load %arg6[%c0_6, %c0_7, %c0_8] : memref<2x225x64xf32, #tpu.memory_space<vmem>>, vector<1x225x64xf32>
    %7 = vector.shape_cast %6 : vector<1x225x64xf32> to vector<225x64xf32>
    %8 = vector.shape_cast %5 : vector<225x64xf32> to vector<1x225x64xf32>
    tpu.vector_store %arg6[%c0_6, %c0_7, %c0_8], %8 {strides = array<i32>} : memref<2x225x64xf32, #tpu.memory_space<vmem>>, vector<1x225x64xf32>,
    %9 = arith.addf %0, %5 : vector<225x64xf32>
    %10 = arith.mulf %5, %5 : vector<225x64xf32>
    %11 = arith.addf %1, %10 : vector<225x64xf32>
    %c0_9 = arith.constant 0 : index
    %c0_10 = arith.constant 0 : index
    %12 = vector.load %arg2[%c0_9, %c0_10] : memref<225x225xf32, #tpu.memory_space<vmem>>, vector<225x225xf32>
    %c1 = arith.constant 1 : index
    %c0_11 = arith.constant 0 : index
    %c0_12 = arith.constant 0 : index
    %13 = vector.load %arg1[%c1, %c0_11, %c0_12] : memref<2x225x64xf32, #tpu.memory_space<vmem>>, vector<1x225x64xf32>
    %14 = vector.shape_cast %13 : vector<1x225x64xf32> to vector<225x64xf32>
    %cst_13 = arith.constant dense<0.000000e+00> : vector<225x64xf32>
    %15 = tpu.matmul %12, %14, %cst_13 {dimension_numbers = #tpu.dot_dimension_numbers<[1], [0], [0], [1], [0, 0, 1, 1], [], []>} : vector<225x225xf32>, vector<225x64xf32>, vector<225x64xf32> -> vector<225x64xf32>
    %c1_14 = arith.constant 1 : index
    %c0_15 = arith.constant 0 : index
    %c0_16 = arith.constant 0 : index
    %16 = vector.load %arg6[%c1_14, %c0_15, %c0_16] : memref<2x225x64xf32, #tpu.memory_space<vmem>>, vector<1x225x64xf32>
    %17 = vector.shape_cast %16 : vector<1x225x64xf32> to vector<225x64xf32>
    %18 = vector.shape_cast %15 : vector<225x64xf32> to vector<1x225x64xf32>
    tpu.vector_store %arg6[%c1_14, %c0_15, %c0_16], %18 {strides = array<i32>} : memref<2x225x64xf32, #tpu.memory_space<vmem>>, vector<1x225x64xf32>,
    %19 = arith.addf %9, %15 : vector<225x64xf32>
    %20 = arith.mulf %15, %15 : vector<225x64xf32>
    %21 = arith.addf %11, %20 : vector<225x64xf32>
    %cst_17 = arith.constant dense<0.000000e+00> : vector<225xf32>
    %22 = vector.multi_reduction <add>, %19, %cst_17 [1] : vector<225x64xf32> to vector<225xf32>
    %23 = vector.shape_cast %22 : vector<225xf32> to vector<225x1xf32>
    %cst_18 = arith.constant 7.812500e-03 : f32
    %24 = vector.broadcast %cst_18 : f32 to vector<225x1xf32>
    %25 = arith.mulf %23, %24 : vector<225x1xf32>
    %cst_19 = arith.constant dense<0.000000e+00> : vector<225xf32>
    %26 = vector.multi_reduction <add>, %21, %cst_19 [1] : vector<225x64xf32> to vector<225xf32>
    %27 = vector.shape_cast %26 : vector<225xf32> to vector<225x1xf32>
    %cst_20 = arith.constant 7.812500e-03 : f32
    %28 = vector.broadcast %cst_20 : f32 to vector<225x1xf32>
    %29 = arith.mulf %27, %28 : vector<225x1xf32>
    %30 = arith.mulf %25, %25 : vector<225x1xf32>
    %31 = arith.subf %29, %30 : vector<225x1xf32>
    %cst_21 = arith.constant 0.000000e+00 : f32
    %32 = vector.broadcast %cst_21 : f32 to vector<225x1xf32>
    %33 = arith.maximumf %31, %32 : vector<225x1xf32>
    %c0_22 = arith.constant 0 : index
    %c0_23 = arith.constant 0 : index
    %34 = vector.load %arg3[%c0_22, %c0_23] : memref<225x1xf32, #tpu.memory_space<vmem>>, vector<225x1xf32>
    %cst_24 = arith.constant 9.99999974E-6 : f32
    %35 = vector.broadcast %cst_24 : f32 to vector<225x1xf32>
    %36 = arith.addf %33, %35 : vector<225x1xf32>
    %37 = math.rsqrt %36 : vector<225x1xf32>
    %38 = arith.mulf %34, %37 : vector<225x1xf32>
    %c0_25 = arith.constant 0 : index
    %c0_26 = arith.constant 0 : index
    %39 = vector.load %arg4[%c0_25, %c0_26] : memref<225x1xf32, #tpu.memory_space<vmem>>, vector<225x1xf32>
    %40 = arith.mulf %25, %38 : vector<225x1xf32>
    %41 = arith.subf %39, %40 : vector<225x1xf32>
    %c0_27 = arith.constant 0 : index
    %c0_28 = arith.constant 0 : index
    %c0_29 = arith.constant 0 : index
    %42 = vector.load %arg6[%c0_27, %c0_28, %c0_29] : memref<2x225x64xf32, #tpu.memory_space<vmem>>, vector<1x225x64xf32>
    %43 = vector.shape_cast %42 : vector<1x225x64xf32> to vector<225x64xf32>
    %44 = vector.broadcast %38 : vector<225x1xf32> to vector<225x64xf32>
    %45 = arith.mulf %43, %44 : vector<225x64xf32>
    %46 = vector.broadcast %41 : vector<225x1xf32> to vector<225x64xf32>
    %47 = arith.addf %45, %46 : vector<225x64xf32>
    %cst_30 = arith.constant 0.000000e+00 : f32
    %48 = vector.broadcast %cst_30 : f32 to vector<225x64xf32>
    %49 = arith.maximumf %47, %48 : vector<225x64xf32>
    %c0_31 = arith.constant 0 : index
    %c0_32 = arith.constant 0 : index
    %c0_33 = arith.constant 0 : index
    %50 = vector.load %arg5[%c0_31, %c0_32, %c0_33] : memref<2x225x64xf32, #tpu.memory_space<vmem>>, vector<1x225x64xf32>
    %51 = vector.shape_cast %50 : vector<1x225x64xf32> to vector<225x64xf32>
    %52 = vector.shape_cast %49 : vector<225x64xf32> to vector<1x225x64xf32>
    tpu.vector_store %arg5[%c0_31, %c0_32, %c0_33], %52 {strides = array<i32>} : memref<2x225x64xf32, #tpu.memory_space<vmem>>, vector<1x225x64xf32>,
    %c1_34 = arith.constant 1 : index
    %c0_35 = arith.constant 0 : index
    %c0_36 = arith.constant 0 : index
    %53 = vector.load %arg6[%c1_34, %c0_35, %c0_36] : memref<2x225x64xf32, #tpu.memory_space<vmem>>, vector<1x225x64xf32>
    %54 = vector.shape_cast %53 : vector<1x225x64xf32> to vector<225x64xf32>
    %55 = vector.broadcast %38 : vector<225x1xf32> to vector<225x64xf32>
    %56 = arith.mulf %54, %55 : vector<225x64xf32>
    %57 = vector.broadcast %41 : vector<225x1xf32> to vector<225x64xf32>
    %58 = arith.addf %56, %57 : vector<225x64xf32>
    %cst_37 = arith.constant 0.000000e+00 : f32
    %59 = vector.broadcast %cst_37 : f32 to vector<225x64xf32>
    %60 = arith.maximumf %58, %59 : vector<225x64xf32>
    %c1_38 = arith.constant 1 : index
    %c0_39 = arith.constant 0 : index
    %c0_40 = arith.constant 0 : index
    %61 = vector.load %arg5[%c1_38, %c0_39, %c0_40] : memref<2x225x64xf32, #tpu.memory_space<vmem>>, vector<1x225x64xf32>
    %62 = vector.shape_cast %61 : vector<1x225x64xf32> to vector<225x64xf32>
    %63 = vector.shape_cast %60 : vector<225x64xf32> to vector<1x225x64xf32>
    tpu.vector_store %arg5[%c1_38, %c0_39, %c0_40], %63 {strides = array<i32>} : memref<2x225x64xf32, #tpu.memory_space<vmem>>, vector<1x225x64xf32>,
    return
  }
  func.func @transform_0(%arg0: i32) -> (i32, i32, i32) {
    %c0_i32 = arith.constant 0 : i32
    %c0_i32_0 = arith.constant 0 : i32
    %c0_i32_1 = arith.constant 0 : i32
    %c0_i32_2 = arith.constant 0 : i32
    return %c0_i32, %c0_i32_0, %c0_i32_1 : i32, i32, i32
  }
  func.func @transform_1(%arg0: i32) -> (i32, i32) {
    %c0_i32 = arith.constant 0 : i32
    %c0_i32_0 = arith.constant 0 : i32
    %c0_i32_1 = arith.constant 0 : i32
    return %c0_i32, %c0_i32_0 : i32, i32
  }
  func.func @transform_2(%arg0: i32) -> (i32, i32) {
    %c0_i32 = arith.constant 0 : i32
    %c0_i32_0 = arith.constant 0 : i32
    %c0_i32_1 = arith.constant 0 : i32
    return %c0_i32, %c0_i32_0 : i32, i32
  }
  func.func @transform_3(%arg0: i32) -> (i32, i32) {
    %c0_i32 = arith.constant 0 : i32
    %c0_i32_0 = arith.constant 0 : i32
    %c0_i32_1 = arith.constant 0 : i32
    return %c0_i32, %c0_i32_0 : i32, i32
  }
  func.func @transform_4(%arg0: i32) -> (i32, i32, i32) {
    %c0_i32 = arith.constant 0 : i32
    %c0_i32_0 = arith.constant 0 : i32
    %c0_i32_1 = arith.constant 0 : i32
    %c0_i32_2 = arith.constant 0 : i32
    return %c0_i32, %c0_i32_0, %c0_i32_1 : i32, i32, i32
  }
}

</mosaic_0001>

<llo_original>
// kernel: model_forward.1
$region0: #{model_forward.1}
  #allocation0 [shape = 'u32[]', space=smem, size = 0x4, offset = 0x4, fixed_abs, tag = 'smem constant byte address 0x4 - core index']
  #allocation1 [shape = 'u32[144,128]{1,0:T(1,128)}', space=vmem, size = 0x12000, scoped, tag = 'internal scratch']
  #allocation2 [shape = 'f32[2,225,64]{2,1,0:T(8,128)}', space=vmem, size = 0x3a000, scoped, tag = 'scratch operand']
  %s0 = inlined_call_operand.vmem [shape: f32[2,225,64], index: 0, kind: input, shape index: {}]
  %s1 = inlined_call_operand.vmem [shape: f32[225,225], index: 1, kind: input, shape index: {}]
  %s2 = inlined_call_operand.vmem [shape: f32[225,1], index: 2, kind: input, shape index: {}]
  %s3 = inlined_call_operand.vmem [shape: f32[225,1], index: 3, kind: input, shape index: {}]
  %s4 = inlined_call_operand.vmem [shape: f32[2,225,64], index: 4, kind: output, shape index: {}]
  %s5 = sld [smem:[#allocation0]]
  $region26: #{model_forward.1} parent=0
    _
  %s7 = ssub.s32 1, %s5
  %s8 = scalar_select 0, %s7, %s5
  // Predicated region
  $region2: #{model_forward.1} parent=0 // pred_check
    _
  $region3: #{model_forward.1} parent=0 // pred_check_branch
    %10 = sbr.rel (0) target = $region5
  $region4: #{model_forward.1} parent=0 // pred_region
    _
  $region5: #{model_forward.1} parent=0 // pred_fallthru
    _
  // Predicated region
  $region6: #{model_forward.1} parent=0 // pred_check
    _
  $region7: #{model_forward.1} parent=0 // pred_check_branch
    %12 = sbr.rel (0) target = $region9
  $region8: #{model_forward.1} parent=0 // pred_region
    _
  $region9: #{model_forward.1} parent=0 // pred_fallthru
    _
  // Predicated region
  $region10: #{model_forward.1} parent=0 // pred_check
    _
  $region11: #{model_forward.1} parent=0 // pred_check_branch
    %14 = sbr.rel (0) target = $region13
  $region12: #{model_forward.1} parent=0 // pred_region
    _
  $region13: #{model_forward.1} parent=0 // pred_fallthru
    _
  // Predicated region
  $region14: #{model_forward.1} parent=0 // pred_check
    _
  $region15: #{model_forward.1} parent=0 // pred_check_branch
    %16 = sbr.rel (0) target = $region17
  $region16: #{model_forward.1} parent=0 // pred_region
    _
  $region17: #{model_forward.1} parent=0 // pred_fallthru
    _
  %v17 = vld [vmem:[%s1] sm:$0xff]
  %v18 = vld [vmem:[%s1 + $0x8] sm:$0xff]
  %v19 = vld [vmem:[%s1 + $0x10] sm:$0xff]
  %v20 = vld [vmem:[%s1 + $0x18] sm:$0xff]
  %v21 = vld [vmem:[%s1 + $0x20] sm:$0xff]
  %v22 = vld [vmem:[%s1 + $0x28] sm:$0xff]
  %v23 = vld [vmem:[%s1 + $0x30] sm:$0xff]
  %v24 = vld [vmem:[%s1 + $0x38] sm:$0xff]
  %v25 = vld [vmem:[%s1 + $0x40] sm:$0xff]
  %v26 = vld [vmem:[%s1 + $0x48] sm:$0xff]
  %v27 = vld [vmem:[%s1 + $0x50] sm:$0xff]
  %v28 = vld [vmem:[%s1 + $0x58] sm:$0xff]
  %v29 = vld [vmem:[%s1 + $0x60] sm:$0xff]
  %v30 = vld [vmem:[%s1 + $0x68] sm:$0xff]
  %v31 = vld [vmem:[%s1 + $0x70] sm:$0xff]
  %v32 = vld [vmem:[%s1 + $0x78] sm:$0xff]
  %v33 = vld [vmem:[%s1 + $0x80] sm:$0xff]
  %v34 = vld [vmem:[%s1 + $0x88] sm:$0xff]
  %v35 = vld [vmem:[%s1 + $0x90] sm:$0xff]
  %v36 = vld [vmem:[%s1 + $0x98] sm:$0xff]
  %v37 = vld [vmem:[%s1 + $0xa0] sm:$0xff]
  %v38 = vld [vmem:[%s1 + $0xa8] sm:$0xff]
  %v39 = vld [vmem:[%s1 + $0xb0] sm:$0xff]
  %v40 = vld [vmem:[%s1 + $0xb8] sm:$0xff]
  %v41 = vld [vmem:[%s1 + $0xc0] sm:$0xff]
  %v42 = vld [vmem:[%s1 + $0xc8] sm:$0xff]
  %v43 = vld [vmem:[%s1 + $0xd0] sm:$0xff]
  %v44 = vld [vmem:[%s1 + $0xd8] sm:$0xff]
  %v45 = vld [vmem:[%s1 + $0xe0] sm:$0xff]
  %v46 = vld [vmem:[%s1 + $0xe8] sm:$0xff]
  %v47 = vld [vmem:[%s1 + $0xf0] sm:$0xff]
  %v48 = vld [vmem:[%s1 + $0xf8] sm:$0xff]
  %v49 = vld [vmem:[%s1 + $0x100] sm:$0xff]
  %v50 = vld [vmem:[%s1 + $0x108] sm:$0xff]
  %v51 = vld [vmem:[%s1 + $0x110] sm:$0xff]
  %v52 = vld [vmem:[%s1 + $0x118] sm:$0xff]
  %v53 = vld [vmem:[%s1 + $0x120] sm:$0xff]
  %v54 = vld [vmem:[%s1 + $0x128] sm:$0xff]
  %v55 = vld [vmem:[%s1 + $0x130] sm:$0xff]
  %v56 = vld [vmem:[%s1 + $0x138] sm:$0xff]
  %v57 = vld [vmem:[%s1 + $0x140] sm:$0xff]
  %v58 = vld [vmem:[%s1 + $0x148] sm:$0xff]
  %v59 = vld [vmem:[%s1 + $0x150] sm:$0xff]
  %v60 = vld [vmem:[%s1 + $0x158] sm:$0xff]
  %v61 = vld [vmem:[%s1 + $0x160] sm:$0xff]
  %v62 = vld [vmem:[%s1 + $0x168] sm:$0xff]
  %v63 = vld [vmem:[%s1 + $0x170] sm:$0xff]
  %v64 = vld [vmem:[%s1 + $0x178] sm:$0xff]
  %v65 = vld [vmem:[%s1 + $0x180] sm:$0xff]
  %v66 = vld [vmem:[%s1 + $0x188] sm:$0xff]
  %v67 = vld [vmem:[%s1 + $0x190] sm:$0xff]
  %v68 = vld [vmem:[%s1 + $0x198] sm:$0xff]
  %v69 = vld [vmem:[%s1 + $0x1a0] sm:$0xff]
  %v70 = vld [vmem:[%s1 + $0x1a8] sm:$0xff]
  %v71 = vld [vmem:[%s1 + $0x1b0] sm:$0xff]
  %v72 = vld [vmem:[%s1 + $0x1b8] sm:$0xff]
  %v73 = vld [vmem:[%s1 + $0x1c0] sm:$0x1]
  %v74 = vld [vmem:[%s1 + $0x1c8] sm:$0x1]
  %v75 = vld [vmem:[%s0] sm:$0xff]
  %v76 = vld [vmem:[%s0 + $0x8] sm:$0xff]
  %v77 = vld [vmem:[%s0 + $0x10] sm:$0xff]
  %v78 = vld [vmem:[%s0 + $0x18] sm:$0xff]
  %v79 = vld [vmem:[%s0 + $0x20] sm:$0xff]
  %v80 = vld [vmem:[%s0 + $0x28] sm:$0xff]
  %v81 = vld [vmem:[%s0 + $0x30] sm:$0xff]
  %v82 = vld [vmem:[%s0 + $0x38] sm:$0xff]
  %v83 = vld [vmem:[%s0 + $0x40] sm:$0xff]
  %v84 = vld [vmem:[%s0 + $0x48] sm:$0xff]
  %v85 = vld [vmem:[%s0 + $0x50] sm:$0xff]
  %v86 = vld [vmem:[%s0 + $0x58] sm:$0xff]
  %v87 = vld [vmem:[%s0 + $0x60] sm:$0xff]
  %v88 = vld [vmem:[%s0 + $0x68] sm:$0xff]
  %v89 = vld [vmem:[%s0 + $0x70] sm:$0xff]
  %v90 = vld [vmem:[%s0 + $0x78] sm:$0xff]
  %v91 = vld [vmem:[%s0 + $0x80] sm:$0xff]
  %v92 = vld [vmem:[%s0 + $0x88] sm:$0xff]
  %v93 = vld [vmem:[%s0 + $0x90] sm:$0xff]
  %v94 = vld [vmem:[%s0 + $0x98] sm:$0xff]
  %v95 = vld [vmem:[%s0 + $0xa0] sm:$0xff]
  %v96 = vld [vmem:[%s0 + $0xa8] sm:$0xff]
  %v97 = vld [vmem:[%s0 + $0xb0] sm:$0xff]
  %v98 = vld [vmem:[%s0 + $0xb8] sm:$0xff]
  %v99 = vld [vmem:[%s0 + $0xc0] sm:$0xff]
  %v100 = vld [vmem:[%s0 + $0xc8] sm:$0xff]
  %v101 = vld [vmem:[%s0 + $0xd0] sm:$0xff]
  %v102 = vld [vmem:[%s0 + $0xd8] sm:$0xff]
  %v103 = vld [vmem:[%s0 + $0xe0] sm:$0x1]
  %vm104 = vcmask 793600
  %v106 = vsel %vm104, %v18, 0
  %v109 = vsel %vm104, %v20, 0
  %v112 = vsel %vm104, %v22, 0
  %v115 = vsel %vm104, %v24, 0
  %v118 = vsel %vm104, %v26, 0
  %v121 = vsel %vm104, %v28, 0
  %v124 = vsel %vm104, %v30, 0
  %v127 = vsel %vm104, %v32, 0
  %v130 = vsel %vm104, %v34, 0
  %v133 = vsel %vm104, %v36, 0
  %v136 = vsel %vm104, %v38, 0
  %v139 = vsel %vm104, %v40, 0
  %v142 = vsel %vm104, %v42, 0
  %v145 = vsel %vm104, %v44, 0
  %v148 = vsel %vm104, %v46, 0
  %v151 = vsel %vm104, %v48, 0
  %v154 = vsel %vm104, %v50, 0
  %v157 = vsel %vm104, %v52, 0
  %v160 = vsel %vm104, %v54, 0
  %v163 = vsel %vm104, %v56, 0
  %v166 = vsel %vm104, %v58, 0
  %v169 = vsel %vm104, %v60, 0
  %v172 = vsel %vm104, %v62, 0
  %v175 = vsel %vm104, %v64, 0
  %v178 = vsel %vm104, %v66, 0
  %v181 = vsel %vm104, %v68, 0
  %v184 = vsel %vm104, %v70, 0
  %v187 = vsel %vm104, %v72, 0
  %v190 = vsel %vm104, %v74, 0
  %vm192 = vcmask 1040384
  %v194 = vsel %vm192, %v103, 0
  %196 = vmatprep.subr.mxu0 0.0
  %197 = vmatpush1.msra.mxu0 %v90
  %198 = vmatprep.subr.mxu0 0.0
  %199 = vmatpush1.msra.mxu0 %v89
  %200 = vmatprep.subr.mxu0 0.0
  %201 = vmatpush1.msra.mxu0 %v88
  %202 = vmatprep.subr.mxu0 0.0
  %203 = vmatpush1.msra.mxu0 %v87
  %204 = vmatprep.subr.mxu0 0.0
  %205 = vmatpush1.msra.mxu0 %v86
  %206 = vmatprep.subr.mxu0 0.0
  %207 = vmatpush1.msra.mxu0 %v85
  %208 = vmatprep.subr.mxu0 0.0
  %209 = vmatpush1.msra.mxu0 %v84
  %210 = vmatprep.subr.mxu0 0.0
  %211 = vmatpush1.msra.mxu0 %v83
  %212 = vmatprep.subr.mxu0 0.0
  %213 = vmatpush1.msra.mxu0 %v82
  %214 = vmatprep.subr.mxu0 0.0
  %215 = vmatpush1.msra.mxu0 %v81
  %216 = vmatprep.subr.mxu0 0.0
  %217 = vmatpush1.msra.mxu0 %v80
  %218 = vmatprep.subr.mxu0 0.0
  %219 = vmatpush1.msra.mxu0 %v79
  %220 = vmatprep.subr.mxu0 0.0
  %221 = vmatpush1.msra.mxu0 %v78
  %222 = vmatprep.subr.mxu0 0.0
  %223 = vmatpush1.msra.mxu0 %v77
  %224 = vmatprep.subr.mxu0 0.0
  %225 = vmatpush1.msra.mxu0 %v76
  %226 = vmatprep.subr.mxu0 0.0
  %227 = vmatpush1.msra.mxu0 %v75
  %228 = vmatprep.subr.mxu0 0.0
  %229 = vmatpush2.msra.mxu0 0.0
  %230 = vmatprep.subr.mxu0 0.0
  %231 = vmatpush2.msra.mxu0 0.0
  %232 = vmatprep.subr.mxu0 0.0
  %233 = vmatpush2.msra.mxu0 0.0
  %234 = vmatprep.subr.mxu0 0.0
  %235 = vmatpush2.msra.mxu0 %v194
  %236 = vmatprep.subr.mxu0 0.0
  %237 = vmatpush2.msra.mxu0 %v102
  %238 = vmatprep.subr.mxu0 0.0
  %239 = vmatpush2.msra.mxu0 %v101
  %240 = vmatprep.subr.mxu0 0.0
  %241 = vmatpush2.msra.mxu0 %v100
  %242 = vmatprep.subr.mxu0 0.0
  %243 = vmatpush2.msra.mxu0 %v99
  %244 = vmatprep.subr.mxu0 0.0
  %245 = vmatpush2.msra.mxu0 %v98
  %246 = vmatprep.subr.mxu0 0.0
  %247 = vmatpush2.msra.mxu0 %v97
  %248 = vmatprep.subr.mxu0 0.0
  %249 = vmatpush2.msra.mxu0 %v96
  %250 = vmatprep.subr.mxu0 0.0
  %251 = vmatpush2.msra.mxu0 %v95
  %252 = vmatprep.subr.mxu0 0.0
  %253 = vmatpush2.msra.mxu0 %v94
  %254 = vmatprep.subr.mxu0 0.0
  %255 = vmatpush2.msra.mxu0 %v93
  %256 = vmatprep.subr.mxu0 0.0
  %257 = vmatpush2.msra.mxu0 %v92
  %258 = vmatprep.subr.mxu0 0.0
  %259 = vmatpush2.msra.mxu0 %v91
  %260 = vmatprep.mubr.f32.mxu0 %v106
  %261 = vmatmul.mubr.f32.gmra.mxu0 %v17
  %v262 = vpop.f32.mrf.mxu0
  %v263 = vadd.f32 0.0, %v262
  %v264 = vpop.f32.mrf.mxu0
  %265 = vmatprep.mubr.f32.mxu0 %v109
  %266 = vmatmul.mubr.f32.gmra.mxu0 %v19
  %v267 = vpop.f32.mrf.mxu0
  %v268 = vadd.f32 0.0, %v267
  %v269 = vpop.f32.mrf.mxu0
  %270 = vmatprep.mubr.f32.mxu0 %v112
  %271 = vmatmul.mubr.f32.gmra.mxu0 %v21
  %v272 = vpop.f32.mrf.mxu0
  %v273 = vadd.f32 0.0, %v272
  %v274 = vpop.f32.mrf.mxu0
  %275 = vmatprep.mubr.f32.mxu0 %v115
  %276 = vmatmul.mubr.f32.gmra.mxu0 %v23
  %v277 = vpop.f32.mrf.mxu0
  %v278 = vadd.f32 0.0, %v277
  %v279 = vpop.f32.mrf.mxu0
  %280 = vmatprep.mubr.f32.mxu0 %v118
  %281 = vmatmul.mubr.f32.gmra.mxu0 %v25
  %v282 = vpop.f32.mrf.mxu0
  %v283 = vadd.f32 0.0, %v282
  %v284 = vpop.f32.mrf.mxu0
  %285 = vmatprep.mubr.f32.mxu0 %v121
  %286 = vmatmul.mubr.f32.gmra.mxu0 %v27
  %v287 = vpop.f32.mrf.mxu0
  %v288 = vadd.f32 0.0, %v287
  %v289 = vpop.f32.mrf.mxu0
  %290 = vmatprep.mubr.f32.mxu0 %v124
  %291 = vmatmul.mubr.f32.gmra.mxu0 %v29
  %v292 = vpop.f32.mrf.mxu0
  %v293 = vadd.f32 0.0, %v292
  %v294 = vpop.f32.mrf.mxu0
  %295 = vmatprep.mubr.f32.mxu0 %v127
  %296 = vmatmul.mubr.f32.gmra.mxu0 %v31
  %v297 = vpop.f32.mrf.mxu0
  %v298 = vadd.f32 0.0, %v297
  %v299 = vpop.f32.mrf.mxu0
  %300 = vmatprep.mubr.f32.mxu0 %v130
  %301 = vmatmul.mubr.f32.gmra.mxu0 %v33
  %v302 = vpop.f32.mrf.mxu0
  %v303 = vadd.f32 0.0, %v302
  %v304 = vpop.f32.mrf.mxu0
  %305 = vmatprep.mubr.f32.mxu0 %v133
  %306 = vmatmul.mubr.f32.gmra.mxu0 %v35
  %v307 = vpop.f32.mrf.mxu0
  %v308 = vadd.f32 0.0, %v307
  %v309 = vpop.f32.mrf.mxu0
  %310 = vmatprep.mubr.f32.mxu0 %v136
  %311 = vmatmul.mubr.f32.gmra.mxu0 %v37
  %v312 = vpop.f32.mrf.mxu0
  %v313 = vadd.f32 0.0, %v312
  %v314 = vpop.f32.mrf.mxu0
  %315 = vmatprep.mubr.f32.mxu0 %v139
  %316 = vmatmul.mubr.f32.gmra.mxu0 %v39
  %v317 = vpop.f32.mrf.mxu0
  %v318 = vadd.f32 0.0, %v317
  %v319 = vpop.f32.mrf.mxu0
  %320 = vmatprep.mubr.f32.mxu0 %v142
  %321 = vmatmul.mubr.f32.gmra.mxu0 %v41
  %v322 = vpop.f32.mrf.mxu0
  %v323 = vadd.f32 0.0, %v322
  %v324 = vpop.f32.mrf.mxu0
  %325 = vmatprep.mubr.f32.mxu0 %v145
  %326 = vmatmul.mubr.f32.gmra.mxu0 %v43
  %v327 = vpop.f32.mrf.mxu0
  %v328 = vadd.f32 0.0, %v327
  %v329 = vpop.f32.mrf.mxu0
  %330 = vmatprep.mubr.f32.mxu0 %v148
  %331 = vmatmul.mubr.f32.gmra.mxu0 %v45
  %v332 = vpop.f32.mrf.mxu0
  %v333 = vadd.f32 0.0, %v332
  %v334 = vpop.f32.mrf.mxu0
  %335 = vmatprep.mubr.f32.mxu0 %v151
  %336 = vmatmul.mubr.f32.gmra.mxu0 %v47
  %v337 = vpop.f32.mrf.mxu0
  %v338 = vadd.f32 0.0, %v337
  %v339 = vpop.f32.mrf.mxu0
  %340 = vmatprep.mubr.f32.mxu0 %v154
  %341 = vmatmul.mubr.f32.gmra.mxu0 %v49
  %v342 = vpop.f32.mrf.mxu0
  %v343 = vadd.f32 0.0, %v342
  %v344 = vpop.f32.mrf.mxu0
  %345 = vmatprep.mubr.f32.mxu0 %v157
  %346 = vmatmul.mubr.f32.gmra.mxu0 %v51
  %v347 = vpop.f32.mrf.mxu0
  %v348 = vadd.f32 0.0, %v347
  %v349 = vpop.f32.mrf.mxu0
  %350 = vmatprep.mubr.f32.mxu0 %v160
  %351 = vmatmul.mubr.f32.gmra.mxu0 %v53
  %v352 = vpop.f32.mrf.mxu0
  %v353 = vadd.f32 0.0, %v352
  %v354 = vpop.f32.mrf.mxu0
  %355 = vmatprep.mubr.f32.mxu0 %v163
  %356 = vmatmul.mubr.f32.gmra.mxu0 %v55
  %v357 = vpop.f32.mrf.mxu0
  %v358 = vadd.f32 0.0, %v357
  %v359 = vpop.f32.mrf.mxu0
  %360 = vmatprep.mubr.f32.mxu0 %v166
  %361 = vmatmul.mubr.f32.gmra.mxu0 %v57
  %v362 = vpop.f32.mrf.mxu0
  %v363 = vadd.f32 0.0, %v362
  %v364 = vpop.f32.mrf.mxu0
  %365 = vmatprep.mubr.f32.mxu0 %v169
  %366 = vmatmul.mubr.f32.gmra.mxu0 %v59
  %v367 = vpop.f32.mrf.mxu0
  %v368 = vadd.f32 0.0, %v367
  %v369 = vpop.f32.mrf.mxu0
  %370 = vmatprep.mubr.f32.mxu0 %v172
  %371 = vmatmul.mubr.f32.gmra.mxu0 %v61
  %v372 = vpop.f32.mrf.mxu0
  %v373 = vadd.f32 0.0, %v372
  %v374 = vpop.f32.mrf.mxu0
  %375 = vmatprep.mubr.f32.mxu0 %v175
  %376 = vmatmul.mubr.f32.gmra.mxu0 %v63
  %v377 = vpop.f32.mrf.mxu0
  %v378 = vadd.f32 0.0, %v377
  %v379 = vpop.f32.mrf.mxu0
  %380 = vmatprep.mubr.f32.mxu0 %v178
  %381 = vmatmul.mubr.f32.gmra.mxu0 %v65
  %v382 = vpop.f32.mrf.mxu0
  %v383 = vadd.f32 0.0, %v382
  %v384 = vpop.f32.mrf.mxu0
  %385 = vmatprep.mubr.f32.mxu0 %v181
  %386 = vmatmul.mubr.f32.gmra.mxu0 %v67
  %v387 = vpop.f32.mrf.mxu0
  %v388 = vadd.f32 0.0, %v387
  %v389 = vpop.f32.mrf.mxu0
  %390 = vmatprep.mubr.f32.mxu0 %v184
  %391 = vmatmul.mubr.f32.gmra.mxu0 %v69
  %v392 = vpop.f32.mrf.mxu0
  %v393 = vadd.f32 0.0, %v392
  %v394 = vpop.f32.mrf.mxu0
  %395 = vmatprep.mubr.f32.mxu0 %v187
  %396 = vmatmul.mubr.f32.gmra.mxu0 %v71
  %v397 = vpop.f32.mrf.mxu0
  %v398 = vadd.f32 0.0, %v397
  %v399 = vpop.f32.mrf.mxu0
  %400 = vmatprep.mubr.f32.mxu0 %v190
  %401 = vmatmul.mubr.f32.gmra.mxu0 %v73
  %v402 = vpop.f32.mrf.mxu0
  %v403 = vadd.f32 0.0, %v402
  %v404 = vpop.f32.mrf.mxu0
  %405 = vdwg.mxu0
  %vm406 = vcmask 523264
  %407 = vst.msk [vmem:[#allocation2] sm:$0xff] %vm406, %v263
  %408 = vst.msk [vmem:[#allocation2 + $0x8] sm:$0xff] %vm406, %v268
  %409 = vst.msk [vmem:[#allocation2 + $0x10] sm:$0xff] %vm406, %v273
  %410 = vst.msk [vmem:[#allocation2 + $0x18] sm:$0xff] %vm406, %v278
  %411 = vst.msk [vmem:[#allocation2 + $0x20] sm:$0xff] %vm406, %v283
  %412 = vst.msk [vmem:[#allocation2 + $0x28] sm:$0xff] %vm406, %v288
  %413 = vst.msk [vmem:[#allocation2 + $0x30] sm:$0xff] %vm406, %v293
  %414 = vst.msk [vmem:[#allocation2 + $0x38] sm:$0xff] %vm406, %v298
  %415 = vst.msk [vmem:[#allocation2 + $0x40] sm:$0xff] %vm406, %v303
  %416 = vst.msk [vmem:[#allocation2 + $0x48] sm:$0xff] %vm406, %v308
  %417 = vst.msk [vmem:[#allocation2 + $0x50] sm:$0xff] %vm406, %v313
  %418 = vst.msk [vmem:[#allocation2 + $0x58] sm:$0xff] %vm406, %v318
  %419 = vst.msk [vmem:[#allocation2 + $0x60] sm:$0xff] %vm406, %v323
  %420 = vst.msk [vmem:[#allocation2 + $0x68] sm:$0xff] %vm406, %v328
  %421 = vst.msk [vmem:[#allocation2 + $0x70] sm:$0xff] %vm406, %v333
  %422 = vst.msk [vmem:[#allocation2 + $0x78] sm:$0xff] %vm406, %v338
  %423 = vst.msk [vmem:[#allocation2 + $0x80] sm:$0xff] %vm406, %v343
  %424 = vst.msk [vmem:[#allocation2 + $0x88] sm:$0xff] %vm406, %v348
  %425 = vst.msk [vmem:[#allocation2 + $0x90] sm:$0xff] %vm406, %v353
  %426 = vst.msk [vmem:[#allocation2 + $0x98] sm:$0xff] %vm406, %v358
  %427 = vst.msk [vmem:[#allocation2 + $0xa0] sm:$0xff] %vm406, %v363
  %428 = vst.msk [vmem:[#allocation2 + $0xa8] sm:$0xff] %vm406, %v368
  %429 = vst.msk [vmem:[#allocation2 + $0xb0] sm:$0xff] %vm406, %v373
  %430 = vst.msk [vmem:[#allocation2 + $0xb8] sm:$0xff] %vm406, %v378
  %431 = vst.msk [vmem:[#allocation2 + $0xc0] sm:$0xff] %vm406, %v383
  %432 = vst.msk [vmem:[#allocation2 + $0xc8] sm:$0xff] %vm406, %v388
  %433 = vst.msk [vmem:[#allocation2 + $0xd0] sm:$0xff] %vm406, %v393
  %434 = vst.msk [vmem:[#allocation2 + $0xd8] sm:$0xff] %vm406, %v398
  %vm435 = vcmask 516096
  %436 = vst.msk [vmem:[#allocation2 + $0xe0] sm:$0x1] %vm435, %v403
  %v437 = vadd.f32 %v263, 0.0
  %v438 = vadd.f32 %v268, 0.0
  %v439 = vadd.f32 %v273, 0.0
  %v440 = vadd.f32 %v278, 0.0
  %v441 = vadd.f32 %v283, 0.0
  %v442 = vadd.f32 %v288, 0.0
  %v443 = vadd.f32 %v293, 0.0
  %v444 = vadd.f32 %v298, 0.0
  %v445 = vadd.f32 %v303, 0.0
  %v446 = vadd.f32 %v308, 0.0
  %v447 = vadd.f32 %v313, 0.0
  %v448 = vadd.f32 %v318, 0.0
  %v449 = vadd.f32 %v323, 0.0
  %v450 = vadd.f32 %v328, 0.0
  %v451 = vadd.f32 %v333, 0.0
  %v452 = vadd.f32 %v338, 0.0
  %v453 = vadd.f32 %v343, 0.0
  %v454 = vadd.f32 %v348, 0.0
  %v455 = vadd.f32 %v353, 0.0
  %v456 = vadd.f32 %v358, 0.0
  %v457 = vadd.f32 %v363, 0.0
  %v458 = vadd.f32 %v368, 0.0
  %v459 = vadd.f32 %v373, 0.0
  %v460 = vadd.f32 %v378, 0.0
  %v461 = vadd.f32 %v383, 0.0
  %v462 = vadd.f32 %v388, 0.0
  %v463 = vadd.f32 %v393, 0.0
  %v464 = vadd.f32 %v398, 0.0
  %v465 = vadd.f32 %v403, 0.0
  %v466 = vmul.f32 %v263, %v263
  %v467 = vmul.f32 %v268, %v268
  %v468 = vmul.f32 %v273, %v273
  %v469 = vmul.f32 %v278, %v278
  %v470 = vmul.f32 %v283, %v283
  %v471 = vmul.f32 %v288, %v288
  %v472 = vmul.f32 %v293, %v293
  %v473 = vmul.f32 %v298, %v298
  %v474 = vmul.f32 %v303, %v303
  %v475 = vmul.f32 %v308, %v308
  %v476 = vmul.f32 %v313, %v313
  %v477 = vmul.f32 %v318, %v318
  %v478 = vmul.f32 %v323, %v323
  %v479 = vmul.f32 %v328, %v328
  %v480 = vmul.f32 %v333, %v333
  %v481 = vmul.f32 %v338, %v338
  %v482 = vmul.f32 %v343, %v343
  %v483 = vmul.f32 %v348, %v348
  %v484 = vmul.f32 %v353, %v353
  %v485 = vmul.f32 %v358, %v358
  %v486 = vmul.f32 %v363, %v363
  %v487 = vmul.f32 %v368, %v368
  %v488 = vmul.f32 %v373, %v373
  %v489 = vmul.f32 %v378, %v378
  %v490 = vmul.f32 %v383, %v383
  %v491 = vmul.f32 %v388, %v388
  %v492 = vmul.f32 %v393, %v393
  %v493 = vmul.f32 %v398, %v398
  %v494 = vmul.f32 %v403, %v403
  %v495 = vadd.f32 %v466, 0.0
  %v496 = vadd.f32 %v467, 0.0
  %v497 = vadd.f32 %v468, 0.0
  %v498 = vadd.f32 %v469, 0.0
  %v499 = vadd.f32 %v470, 0.0
  %v500 = vadd.f32 %v471, 0.0
  %v501 = vadd.f32 %v472, 0.0
  %v502 = vadd.f32 %v473, 0.0
  %v503 = vadd.f32 %v474, 0.0
  %v504 = vadd.f32 %v475, 0.0
  %v505 = vadd.f32 %v476, 0.0
  %v506 = vadd.f32 %v477, 0.0
  %v507 = vadd.f32 %v478, 0.0
  %v508 = vadd.f32 %v479, 0.0
  %v509 = vadd.f32 %v480, 0.0
  %v510 = vadd.f32 %v481, 0.0
  %v511 = vadd.f32 %v482, 0.0
  %v512 = vadd.f32 %v483, 0.0
  %v513 = vadd.f32 %v484, 0.0
  %v514 = vadd.f32 %v485, 0.0
  %v515 = vadd.f32 %v486, 0.0
  %v516 = vadd.f32 %v487, 0.0
  %v517 = vadd.f32 %v488, 0.0
  %v518 = vadd.f32 %v489, 0.0
  %v519 = vadd.f32 %v490, 0.0
  %v520 = vadd.f32 %v491, 0.0
  %v521 = vadd.f32 %v492, 0.0
  %v522 = vadd.f32 %v493, 0.0
  %v523 = vadd.f32 %v494, 0.0
  %v524 = vld [vmem:[%s1] sm:$0xff]
  %v525 = vld [vmem:[%s1 + $0x8] sm:$0xff]
  %v526 = vld [vmem:[%s1 + $0x10] sm:$0xff]
  %v527 = vld [vmem:[%s1 + $0x18] sm:$0xff]
  %v528 = vld [vmem:[%s1 + $0x20] sm:$0xff]
  %v529 = vld [vmem:[%s1 + $0x28] sm:$0xff]
  %v530 = vld [vmem:[%s1 + $0x30] sm:$0xff]
  %v531 = vld [vmem:[%s1 + $0x38] sm:$0xff]
  %v532 = vld [vmem:[%s1 + $0x40] sm:$0xff]
  %v533 = vld [vmem:[%s1 + $0x48] sm:$0xff]
  %v534 = vld [vmem:[%s1 + $0x50] sm:$0xff]
  %v535 = vld [vmem:[%s1 + $0x58] sm:$0xff]
  %v536 = vld [vmem:[%s1 + $0x60] sm:$0xff]
  %v537 = vld [vmem:[%s1 + $0x68] sm:$0xff]
  %v538 = vld [vmem:[%s1 + $0x70] sm:$0xff]
  %v539 = vld [vmem:[%s1 + $0x78] sm:$0xff]
  %v540 = vld [vmem:[%s1 + $0x80] sm:$0xff]
  %v541 = vld [vmem:[%s1 + $0x88] sm:$0xff]
  %v542 = vld [vmem:[%s1 + $0x90] sm:$0xff]
  %v543 = vld [vmem:[%s1 + $0x98] sm:$0xff]
  %v544 = vld [vmem:[%s1 + $0xa0] sm:$0xff]
  %v545 = vld [vmem:[%s1 + $0xa8] sm:$0xff]
  %v546 = vld [vmem:[%s1 + $0xb0] sm:$0xff]
  %v547 = vld [vmem:[%s1 + $0xb8] sm:$0xff]
  %v548 = vld [vmem:[%s1 + $0xc0] sm:$0xff]
  %v549 = vld [vmem:[%s1 + $0xc8] sm:$0xff]
  %v550 = vld [vmem:[%s1 + $0xd0] sm:$0xff]
  %v551 = vld [vmem:[%s1 + $0xd8] sm:$0xff]
  %v552 = vld [vmem:[%s1 + $0xe0] sm:$0xff]
  %v553 = vld [vmem:[%s1 + $0xe8] sm:$0xff]
  %v554 = vld [vmem:[%s1 + $0xf0] sm:$0xff]
  %v555 = vld [vmem:[%s1 + $0xf8] sm:$0xff]
  %v556 = vld [vmem:[%s1 + $0x100] sm:$0xff]
  %v557 = vld [vmem:[%s1 + $0x108] sm:$0xff]
  %v558 = vld [vmem:[%s1 + $0x110] sm:$0xff]
  %v559 = vld [vmem:[%s1 + $0x118] sm:$0xff]
  %v560 = vld [vmem:[%s1 + $0x120] sm:$0xff]
  %v561 = vld [vmem:[%s1 + $0x128] sm:$0xff]
  %v562 = vld [vmem:[%s1 + $0x130] sm:$0xff]
  %v563 = vld [vmem:[%s1 + $0x138] sm:$0xff]
  %v564 = vld [vmem:[%s1 + $0x140] sm:$0xff]
  %v565 = vld [vmem:[%s1 + $0x148] sm:$0xff]
  %v566 = vld [vmem:[%s1 + $0x150] sm:$0xff]
  %v567 = vld [vmem:[%s1 + $0x158] sm:$0xff]
  %v568 = vld [vmem:[%s1 + $0x160] sm:$0xff]
  %v569 = vld [vmem:[%s1 + $0x168] sm:$0xff]
  %v570 = vld [vmem:[%s1 + $0x170] sm:$0xff]
  %v571 = vld [vmem:[%s1 + $0x178] sm:$0xff]
  %v572 = vld [vmem:[%s1 + $0x180] sm:$0xff]
  %v573 = vld [vmem:[%s1 + $0x188] sm:$0xff]
  %v574 = vld [vmem:[%s1 + $0x190] sm:$0xff]
  %v575 = vld [vmem:[%s1 + $0x198] sm:$0xff]
  %v576 = vld [vmem:[%s1 + $0x1a0] sm:$0xff]
  %v577 = vld [vmem:[%s1 + $0x1a8] sm:$0xff]
  %v578 = vld [vmem:[%s1 + $0x1b0] sm:$0xff]
  %v579 = vld [vmem:[%s1 + $0x1b8] sm:$0xff]
  %v580 = vld [vmem:[%s1 + $0x1c0] sm:$0x1]
  %v581 = vld [vmem:[%s1 + $0x1c8] sm:$0x1]
  %s582 = scalar_lea.vmem %s0, 232
  %v583 = vld [vmem:[%s582] sm:$0xff]
  %v584 = vld [vmem:[%s582 + $0x8] sm:$0xff]
  %v585 = vld [vmem:[%s582 + $0x10] sm:$0xff]
  %v586 = vld [vmem:[%s582 + $0x18] sm:$0xff]
  %v587 = vld [vmem:[%s582 + $0x20] sm:$0xff]
  %v588 = vld [vmem:[%s582 + $0x28] sm:$0xff]
  %v589 = vld [vmem:[%s582 + $0x30] sm:$0xff]
  %v590 = vld [vmem:[%s582 + $0x38] sm:$0xff]
  %v591 = vld [vmem:[%s582 + $0x40] sm:$0xff]
  %v592 = vld [vmem:[%s582 + $0x48] sm:$0xff]
  %v593 = vld [vmem:[%s582 + $0x50] sm:$0xff]
  %v594 = vld [vmem:[%s582 + $0x58] sm:$0xff]
  %v595 = vld [vmem:[%s582 + $0x60] sm:$0xff]
  %v596 = vld [vmem:[%s582 + $0x68] sm:$0xff]
  %v597 = vld [vmem:[%s582 + $0x70] sm:$0xff]
  %v598 = vld [vmem:[%s582 + $0x78] sm:$0xff]
  %v599 = vld [vmem:[%s582 + $0x80] sm:$0xff]
  %v600 = vld [vmem:[%s582 + $0x88] sm:$0xff]
  %v601 = vld [vmem:[%s582 + $0x90] sm:$0xff]
  %v602 = vld [vmem:[%s582 + $0x98] sm:$0xff]
  %v603 = vld [vmem:[%s582 + $0xa0] sm:$0xff]
  %v604 = vld [vmem:[%s582 + $0xa8] sm:$0xff]
  %v605 = vld [vmem:[%s582 + $0xb0] sm:$0xff]
  %v606 = vld [vmem:[%s582 + $0xb8] sm:$0xff]
  %v607 = vld [vmem:[%s582 + $0xc0] sm:$0xff]
  %v608 = vld [vmem:[%s582 + $0xc8] sm:$0xff]
  %v609 = vld [vmem:[%s582 + $0xd0] sm:$0xff]
  %v610 = vld [vmem:[%s582 + $0xd8] sm:$0xff]
  %v611 = vld [vmem:[%s582 + $0xe0] sm:$0x1]
  %v613 = vsel %vm104, %v525, 0
  %v616 = vsel %vm104, %v527, 0
  %v619 = vsel %vm104, %v529, 0
  %v622 = vsel %vm104, %v531, 0
  %v625 = vsel %vm104, %v533, 0
  %v628 = vsel %vm104, %v535, 0
  %v631 = vsel %vm104, %v537, 0
  %v634 = vsel %vm104, %v539, 0
  %v637 = vsel %vm104, %v541, 0
  %v640 = vsel %vm104, %v543, 0
  %v643 = vsel %vm104, %v545, 0
  %v646 = vsel %vm104, %v547, 0
  %v649 = vsel %vm104, %v549, 0
  %v652 = vsel %vm104, %v551, 0
  %v655 = vsel %vm104, %v553, 0
  %v658 = vsel %vm104, %v555, 0
  %v661 = vsel %vm104, %v557, 0
  %v664 = vsel %vm104, %v559, 0
  %v667 = vsel %vm104, %v561, 0
  %v670 = vsel %vm104, %v563, 0
  %v673 = vsel %vm104, %v565, 0
  %v676 = vsel %vm104, %v567, 0
  %v679 = vsel %vm104, %v569, 0
  %v682 = vsel %vm104, %v571, 0
  %v685 = vsel %vm104, %v573, 0
  %v688 = vsel %vm104, %v575, 0
  %v691 = vsel %vm104, %v577, 0
  %v694 = vsel %vm104, %v579, 0
  %v697 = vsel %vm104, %v581, 0
  %v700 = vsel %vm192, %v611, 0
  %702 = vmatprep.subr.mxu0 0.0
  %703 = vmatpush1.msra.mxu0 %v598
  %704 = vmatprep.subr.mxu0 0.0
  %705 = vmatpush1.msra.mxu0 %v597
  %706 = vmatprep.subr.mxu0 0.0
  %707 = vmatpush1.msra.mxu0 %v596
  %708 = vmatprep.subr.mxu0 0.0
  %709 = vmatpush1.msra.mxu0 %v595
  %710 = vmatprep.subr.mxu0 0.0
  %711 = vmatpush1.msra.mxu0 %v594
  %712 = vmatprep.subr.mxu0 0.0
  %713 = vmatpush1.msra.mxu0 %v593
  %714 = vmatprep.subr.mxu0 0.0
  %715 = vmatpush1.msra.mxu0 %v592
  %716 = vmatprep.subr.mxu0 0.0
  %717 = vmatpush1.msra.mxu0 %v591
  %718 = vmatprep.subr.mxu0 0.0
  %719 = vmatpush1.msra.mxu0 %v590
  %720 = vmatprep.subr.mxu0 0.0
  %721 = vmatpush1.msra.mxu0 %v589
  %722 = vmatprep.subr.mxu0 0.0
  %723 = vmatpush1.msra.mxu0 %v588
  %724 = vmatprep.subr.mxu0 0.0
  %725 = vmatpush1.msra.mxu0 %v587
  %726 = vmatprep.subr.mxu0 0.0
  %727 = vmatpush1.msra.mxu0 %v586
  %728 = vmatprep.subr.mxu0 0.0
  %729 = vmatpush1.msra.mxu0 %v585
  %730 = vmatprep.subr.mxu0 0.0
  %731 = vmatpush1.msra.mxu0 %v584
  %732 = vmatprep.subr.mxu0 0.0
  %733 = vmatpush1.msra.mxu0 %v583
  %734 = vmatprep.subr.mxu0 0.0
  %735 = vmatpush2.msra.mxu0 0.0
  %736 = vmatprep.subr.mxu0 0.0
  %737 = vmatpush2.msra.mxu0 0.0
  %738 = vmatprep.subr.mxu0 0.0
  %739 = vmatpush2.msra.mxu0 0.0
  %740 = vmatprep.subr.mxu0 0.0
  %741 = vmatpush2.msra.mxu0 %v700
  %742 = vmatprep.subr.mxu0 0.0
  %743 = vmatpush2.msra.mxu0 %v610
  %744 = vmatprep.subr.mxu0 0.0
  %745 = vmatpush2.msra.mxu0 %v609
  %746 = vmatprep.subr.mxu0 0.0
  %747 = vmatpush2.msra.mxu0 %v608
  %748 = vmatprep.subr.mxu0 0.0
  %749 = vmatpush2.msra.mxu0 %v607
  %750 = vmatprep.subr.mxu0 0.0
  %751 = vmatpush2.msra.mxu0 %v606
  %752 = vmatprep.subr.mxu0 0.0
  %753 = vmatpush2.msra.mxu0 %v605
  %754 = vmatprep.subr.mxu0 0.0
  %755 = vmatpush2.msra.mxu0 %v604
  %756 = vmatprep.subr.mxu0 0.0
  %757 = vmatpush2.msra.mxu0 %v603
  %758 = vmatprep.subr.mxu0 0.0
  %759 = vmatpush2.msra.mxu0 %v602
  %760 = vmatprep.subr.mxu0 0.0
  %761 = vmatpush2.msra.mxu0 %v601
  %762 = vmatprep.subr.mxu0 0.0
  %763 = vmatpush2.msra.mxu0 %v600
  %764 = vmatprep.subr.mxu0 0.0
  %765 = vmatpush2.msra.mxu0 %v599
  %766 = vmatprep.mubr.f32.mxu0 %v613
  %767 = vmatmul.mubr.f32.gmra.mxu0 %v524
  %v768 = vpop.f32.mrf.mxu0
  %v769 = vadd.f32 0.0, %v768
  %v770 = vpop.f32.mrf.mxu0
  %771 = vmatprep.mubr.f32.mxu0 %v616
  %772 = vmatmul.mubr.f32.gmra.mxu0 %v526
  %v773 = vpop.f32.mrf.mxu0
  %v774 = vadd.f32 0.0, %v773
  %v775 = vpop.f32.mrf.mxu0
  %776 = vmatprep.mubr.f32.mxu0 %v619
  %777 = vmatmul.mubr.f32.gmra.mxu0 %v528
  %v778 = vpop.f32.mrf.mxu0
  %v779 = vadd.f32 0.0, %v778
  %v780 = vpop.f32.mrf.mxu0
  %781 = vmatprep.mubr.f32.mxu0 %v622
  %782 = vmatmul.mubr.f32.gmra.mxu0 %v530
  %v783 = vpop.f32.mrf.mxu0
  %v784 = vadd.f32 0.0, %v783
  %v785 = vpop.f32.mrf.mxu0
  %786 = vmatprep.mubr.f32.mxu0 %v625
  %787 = vmatmul.mubr.f32.gmra.mxu0 %v532
  %v788 = vpop.f32.mrf.mxu0
  %v789 = vadd.f32 0.0, %v788
  %v790 = vpop.f32.mrf.mxu0
  %791 = vmatprep.mubr.f32.mxu0 %v628
  %792 = vmatmul.mubr.f32.gmra.mxu0 %v534
  %v793 = vpop.f32.mrf.mxu0
  %v794 = vadd.f32 0.0, %v793
  %v795 = vpop.f32.mrf.mxu0
  %796 = vmatprep.mubr.f32.mxu0 %v631
  %797 = vmatmul.mubr.f32.gmra.mxu0 %v536
  %v798 = vpop.f32.mrf.mxu0
  %v799 = vadd.f32 0.0, %v798
  %v800 = vpop.f32.mrf.mxu0
  %801 = vmatprep.mubr.f32.mxu0 %v634
  %802 = vmatmul.mubr.f32.gmra.mxu0 %v538
  %v803 = vpop.f32.mrf.mxu0
  %v804 = vadd.f32 0.0, %v803
  %v805 = vpop.f32.mrf.mxu0
  %806 = vmatprep.mubr.f32.mxu0 %v637
  %807 = vmatmul.mubr.f32.gmra.mxu0 %v540
  %v808 = vpop.f32.mrf.mxu0
  %v809 = vadd.f32 0.0, %v808
  %v810 = vpop.f32.mrf.mxu0
  %811 = vmatprep.mubr.f32.mxu0 %v640
  %812 = vmatmul.mubr.f32.gmra.mxu0 %v542
  %v813 = vpop.f32.mrf.mxu0
  %v814 = vadd.f32 0.0, %v813
  %v815 = vpop.f32.mrf.mxu0
  %816 = vmatprep.mubr.f32.mxu0 %v643
  %817 = vmatmul.mubr.f32.gmra.mxu0 %v544
  %v818 = vpop.f32.mrf.mxu0
  %v819 = vadd.f32 0.0, %v818
  %v820 = vpop.f32.mrf.mxu0
  %821 = vmatprep.mubr.f32.mxu0 %v646
  %822 = vmatmul.mubr.f32.gmra.mxu0 %v546
  %v823 = vpop.f32.mrf.mxu0
  %v824 = vadd.f32 0.0, %v823
  %v825 = vpop.f32.mrf.mxu0
  %826 = vmatprep.mubr.f32.mxu0 %v649
  %827 = vmatmul.mubr.f32.gmra.mxu0 %v548
  %v828 = vpop.f32.mrf.mxu0
  %v829 = vadd.f32 0.0, %v828
  %v830 = vpop.f32.mrf.mxu0
  %831 = vmatprep.mubr.f32.mxu0 %v652
  %832 = vmatmul.mubr.f32.gmra.mxu0 %v550
  %v833 = vpop.f32.mrf.mxu0
  %v834 = vadd.f32 0.0, %v833
  %v835 = vpop.f32.mrf.mxu0
  %836 = vmatprep.mubr.f32.mxu0 %v655
  %837 = vmatmul.mubr.f32.gmra.mxu0 %v552
  %v838 = vpop.f32.mrf.mxu0
  %v839 = vadd.f32 0.0, %v838
  %v840 = vpop.f32.mrf.mxu0
  %841 = vmatprep.mubr.f32.mxu0 %v658
  %842 = vmatmul.mubr.f32.gmra.mxu0 %v554
  %v843 = vpop.f32.mrf.mxu0
  %v844 = vadd.f32 0.0, %v843
  %v845 = vpop.f32.mrf.mxu0
  %846 = vmatprep.mubr.f32.mxu0 %v661
  %847 = vmatmul.mubr.f32.gmra.mxu0 %v556
  %v848 = vpop.f32.mrf.mxu0
  %v849 = vadd.f32 0.0, %v848
  %v850 = vpop.f32.mrf.mxu0
  %851 = vmatprep.mubr.f32.mxu0 %v664
  %852 = vmatmul.mubr.f32.gmra.mxu0 %v558
  %v853 = vpop.f32.mrf.mxu0
  %v854 = vadd.f32 0.0, %v853
  %v855 = vpop.f32.mrf.mxu0
  %856 = vmatprep.mubr.f32.mxu0 %v667
  %857 = vmatmul.mubr.f32.gmra.mxu0 %v560
  %v858 = vpop.f32.mrf.mxu0
  %v859 = vadd.f32 0.0, %v858
  %v860 = vpop.f32.mrf.mxu0
  %861 = vmatprep.mubr.f32.mxu0 %v670
  %862 = vmatmul.mubr.f32.gmra.mxu0 %v562
  %v863 = vpop.f32.mrf.mxu0
  %v864 = vadd.f32 0.0, %v863
  %v865 = vpop.f32.mrf.mxu0
  %866 = vmatprep.mubr.f32.mxu0 %v673
  %867 = vmatmul.mubr.f32.gmra.mxu0 %v564
  %v868 = vpop.f32.mrf.mxu0
  %v869 = vadd.f32 0.0, %v868
  %v870 = vpop.f32.mrf.mxu0
  %871 = vmatprep.mubr.f32.mxu0 %v676
  %872 = vmatmul.mubr.f32.gmra.mxu0 %v566
  %v873 = vpop.f32.mrf.mxu0
  %v874 = vadd.f32 0.0, %v873
  %v875 = vpop.f32.mrf.mxu0
  %876 = vmatprep.mubr.f32.mxu0 %v679
  %877 = vmatmul.mubr.f32.gmra.mxu0 %v568
  %v878 = vpop.f32.mrf.mxu0
  %v879 = vadd.f32 0.0, %v878
  %v880 = vpop.f32.mrf.mxu0
  %881 = vmatprep.mubr.f32.mxu0 %v682
  %882 = vmatmul.mubr.f32.gmra.mxu0 %v570
  %v883 = vpop.f32.mrf.mxu0
  %v884 = vadd.f32 0.0, %v883
  %v885 = vpop.f32.mrf.mxu0
  %886 = vmatprep.mubr.f32.mxu0 %v685
  %887 = vmatmul.mubr.f32.gmra.mxu0 %v572
  %v888 = vpop.f32.mrf.mxu0
  %v889 = vadd.f32 0.0, %v888
  %v890 = vpop.f32.mrf.mxu0
  %891 = vmatprep.mubr.f32.mxu0 %v688
  %892 = vmatmul.mubr.f32.gmra.mxu0 %v574
  %v893 = vpop.f32.mrf.mxu0
  %v894 = vadd.f32 0.0, %v893
  %v895 = vpop.f32.mrf.mxu0
  %896 = vmatprep.mubr.f32.mxu0 %v691
  %897 = vmatmul.mubr.f32.gmra.mxu0 %v576
  %v898 = vpop.f32.mrf.mxu0
  %v899 = vadd.f32 0.0, %v898
  %v900 = vpop.f32.mrf.mxu0
  %901 = vmatprep.mubr.f32.mxu0 %v694
  %902 = vmatmul.mubr.f32.gmra.mxu0 %v578
  %v903 = vpop.f32.mrf.mxu0
  %v904 = vadd.f32 0.0, %v903
  %v905 = vpop.f32.mrf.mxu0
  %906 = vmatprep.mubr.f32.mxu0 %v697
  %907 = vmatmul.mubr.f32.gmra.mxu0 %v580
  %v908 = vpop.f32.mrf.mxu0
  %v909 = vadd.f32 0.0, %v908
  %v910 = vpop.f32.mrf.mxu0
  %911 = vdwg.mxu0
  %s912 = scalar_lea.vmem [#allocation2], 232
  %913 = vst.msk [vmem:[%s912] sm:$0xff] %vm406, %v769
  %914 = vst.msk [vmem:[%s912 + $0x8] sm:$0xff] %vm406, %v774
  %915 = vst.msk [vmem:[%s912 + $0x10] sm:$0xff] %vm406, %v779
  %916 = vst.msk [vmem:[%s912 + $0x18] sm:$0xff] %vm406, %v784
  %917 = vst.msk [vmem:[%s912 + $0x20] sm:$0xff] %vm406, %v789
  %918 = vst.msk [vmem:[%s912 + $0x28] sm:$0xff] %vm406, %v794
  %919 = vst.msk [vmem:[%s912 + $0x30] sm:$0xff] %vm406, %v799
  %920 = vst.msk [vmem:[%s912 + $0x38] sm:$0xff] %vm406, %v804
  %921 = vst.msk [vmem:[%s912 + $0x40] sm:$0xff] %vm406, %v809
  %922 = vst.msk [vmem:[%s912 + $0x48] sm:$0xff] %vm406, %v814
  %923 = vst.msk [vmem:[%s912 + $0x50] sm:$0xff] %vm406, %v819
  %924 = vst.msk [vmem:[%s912 + $0x58] sm:$0xff] %vm406, %v824
  %925 = vst.msk [vmem:[%s912 + $0x60] sm:$0xff] %vm406, %v829
  %926 = vst.msk [vmem:[%s912 + $0x68] sm:$0xff] %vm406, %v834
  %927 = vst.msk [vmem:[%s912 + $0x70] sm:$0xff] %vm406, %v839
  %928 = vst.msk [vmem:[%s912 + $0x78] sm:$0xff] %vm406, %v844
  %929 = vst.msk [vmem:[%s912 + $0x80] sm:$0xff] %vm406, %v849
  %930 = vst.msk [vmem:[%s912 + $0x88] sm:$0xff] %vm406, %v854
  %931 = vst.msk [vmem:[%s912 + $0x90] sm:$0xff] %vm406, %v859
  %932 = vst.msk [vmem:[%s912 + $0x98] sm:$0xff] %vm406, %v864
  %933 = vst.msk [vmem:[%s912 + $0xa0] sm:$0xff] %vm406, %v869
  %934 = vst.msk [vmem:[%s912 + $0xa8] sm:$0xff] %vm406, %v874
  %935 = vst.msk [vmem:[%s912 + $0xb0] sm:$0xff] %vm406, %v879
  %936 = vst.msk [vmem:[%s912 + $0xb8] sm:$0xff] %vm406, %v884
  %937 = vst.msk [vmem:[%s912 + $0xc0] sm:$0xff] %vm406, %v889
  %938 = vst.msk [vmem:[%s912 + $0xc8] sm:$0xff] %vm406, %v894
  %939 = vst.msk [vmem:[%s912 + $0xd0] sm:$0xff] %vm406, %v899
  %940 = vst.msk [vmem:[%s912 + $0xd8] sm:$0xff] %vm406, %v904
  %941 = vst.msk [vmem:[%s912 + $0xe0] sm:$0x1] %vm435, %v909
  %v942 = vadd.f32 %v437, %v769
  %v943 = vadd.f32 %v438, %v774
  %v944 = vadd.f32 %v439, %v779
  %v945 = vadd.f32 %v440, %v784
  %v946 = vadd.f32 %v441, %v789
  %v947 = vadd.f32 %v442, %v794
  %v948 = vadd.f32 %v443, %v799
  %v949 = vadd.f32 %v444, %v804
  %v950 = vadd.f32 %v445, %v809
  %v951 = vadd.f32 %v446, %v814
  %v952 = vadd.f32 %v447, %v819
  %v953 = vadd.f32 %v448, %v824
  %v954 = vadd.f32 %v449, %v829
  %v955 = vadd.f32 %v450, %v834
  %v956 = vadd.f32 %v451, %v839
  %v957 = vadd.f32 %v452, %v844
  %v958 = vadd.f32 %v453, %v849
  %v959 = vadd.f32 %v454, %v854
  %v960 = vadd.f32 %v455, %v859
  %v961 = vadd.f32 %v456, %v864
  %v962 = vadd.f32 %v457, %v869
  %v963 = vadd.f32 %v458, %v874
  %v964 = vadd.f32 %v459, %v879
  %v965 = vadd.f32 %v460, %v884
  %v966 = vadd.f32 %v461, %v889
  %v967 = vadd.f32 %v462, %v894
  %v968 = vadd.f32 %v463, %v899
  %v969 = vadd.f32 %v464, %v904
  %v970 = vadd.f32 %v465, %v909
  %v971 = vmul.f32 %v769, %v769
  %v972 = vmul.f32 %v774, %v774
  %v973 = vmul.f32 %v779, %v779
  %v974 = vmul.f32 %v784, %v784
  %v975 = vmul.f32 %v789, %v789
  %v976 = vmul.f32 %v794, %v794
  %v977 = vmul.f32 %v799, %v799
  %v978 = vmul.f32 %v804, %v804
  %v979 = vmul.f32 %v809, %v809
  %v980 = vmul.f32 %v814, %v814
  %v981 = vmul.f32 %v819, %v819
  %v982 = vmul.f32 %v824, %v824
  %v983 = vmul.f32 %v829, %v829
  %v984 = vmul.f32 %v834, %v834
  %v985 = vmul.f32 %v839, %v839
  %v986 = vmul.f32 %v844, %v844
  %v987 = vmul.f32 %v849, %v849
  %v988 = vmul.f32 %v854, %v854
  %v989 = vmul.f32 %v859, %v859
  %v990 = vmul.f32 %v864, %v864
  %v991 = vmul.f32 %v869, %v869
  %v992 = vmul.f32 %v874, %v874
  %v993 = vmul.f32 %v879, %v879
  %v994 = vmul.f32 %v884, %v884
  %v995 = vmul.f32 %v889, %v889
  %v996 = vmul.f32 %v894, %v894
  %v997 = vmul.f32 %v899, %v899
  %v998 = vmul.f32 %v904, %v904
  %v999 = vmul.f32 %v909, %v909
  %v1000 = vadd.f32 %v495, %v971
  %v1001 = vadd.f32 %v496, %v972
  %v1002 = vadd.f32 %v497, %v973
  %v1003 = vadd.f32 %v498, %v974
  %v1004 = vadd.f32 %v499, %v975
  %v1005 = vadd.f32 %v500, %v976
  %v1006 = vadd.f32 %v501, %v977
  %v1007 = vadd.f32 %v502, %v978
  %v1008 = vadd.f32 %v503, %v979
  %v1009 = vadd.f32 %v504, %v980
  %v1010 = vadd.f32 %v505, %v981
  %v1011 = vadd.f32 %v506, %v982
  %v1012 = vadd.f32 %v507, %v983
  %v1013 = vadd.f32 %v508, %v984
  %v1014 = vadd.f32 %v509, %v985
  %v1015 = vadd.f32 %v510, %v986
  %v1016 = vadd.f32 %v511, %v987
  %v1017 = vadd.f32 %v512, %v988
  %v1018 = vadd.f32 %v513, %v989
  %v1019 = vadd.f32 %v514, %v990
  %v1020 = vadd.f32 %v515, %v991
  %v1021 = vadd.f32 %v516, %v992
  %v1022 = vadd.f32 %v517, %v993
  %v1023 = vadd.f32 %v518, %v994
  %v1024 = vadd.f32 %v519, %v995
  %v1025 = vadd.f32 %v520, %v996
  %v1026 = vadd.f32 %v521, %v997
  %v1027 = vadd.f32 %v522, %v998
  %v1028 = vadd.f32 %v523, %v999
  %v1029 = vsel %vm406, %v942, 0.0
  %1030 = vadd.xlane.f32.xlu0 %v1029
  %v1031 = vpop.xlane.xlu0 %1030
  %v1032 = vsel %vm406, %v943, 0.0
  %1033 = vadd.xlane.f32.xlu0 %v1032
  %v1034 = vpop.xlane.xlu0 %1033
  %v1035 = vsel %vm406, %v944, 0.0
  %1036 = vadd.xlane.f32.xlu0 %v1035
  %v1037 = vpop.xlane.xlu0 %1036
  %v1038 = vsel %vm406, %v945, 0.0
  %1039 = vadd.xlane.f32.xlu0 %v1038
  %v1040 = vpop.xlane.xlu0 %1039
  %v1041 = vsel %vm406, %v946, 0.0
  %1042 = vadd.xlane.f32.xlu0 %v1041
  %v1043 = vpop.xlane.xlu0 %1042
  %v1044 = vsel %vm406, %v947, 0.0
  %1045 = vadd.xlane.f32.xlu0 %v1044
  %v1046 = vpop.xlane.xlu0 %1045
  %v1047 = vsel %vm406, %v948, 0.0
  %1048 = vadd.xlane.f32.xlu0 %v1047
  %v1049 = vpop.xlane.xlu0 %1048
  %v1050 = vsel %vm406, %v949, 0.0
  %1051 = vadd.xlane.f32.xlu0 %v1050
  %v1052 = vpop.xlane.xlu0 %1051
  %v1053 = vsel %vm406, %v950, 0.0
  %1054 = vadd.xlane.f32.xlu0 %v1053
  %v1055 = vpop.xlane.xlu0 %1054
  %v1056 = vsel %vm406, %v951, 0.0
  %1057 = vadd.xlane.f32.xlu0 %v1056
  %v1058 = vpop.xlane.xlu0 %1057
  %v1059 = vsel %vm406, %v952, 0.0
  %1060 = vadd.xlane.f32.xlu0 %v1059
  %v1061 = vpop.xlane.xlu0 %1060
  %v1062 = vsel %vm406, %v953, 0.0
  %1063 = vadd.xlane.f32.xlu0 %v1062
  %v1064 = vpop.xlane.xlu0 %1063
  %v1065 = vsel %vm406, %v954, 0.0
  %1066 = vadd.xlane.f32.xlu0 %v1065
  %v1067 = vpop.xlane.xlu0 %1066
  %v1068 = vsel %vm406, %v955, 0.0
  %1069 = vadd.xlane.f32.xlu0 %v1068
  %v1070 = vpop.xlane.xlu0 %1069
  %v1071 = vsel %vm406, %v956, 0.0
  %1072 = vadd.xlane.f32.xlu0 %v1071
  %v1073 = vpop.xlane.xlu0 %1072
  %v1074 = vsel %vm406, %v957, 0.0
  %1075 = vadd.xlane.f32.xlu0 %v1074
  %v1076 = vpop.xlane.xlu0 %1075
  %v1077 = vsel %vm406, %v958, 0.0
  %1078 = vadd.xlane.f32.xlu0 %v1077
  %v1079 = vpop.xlane.xlu0 %1078
  %v1080 = vsel %vm406, %v959, 0.0
  %1081 = vadd.xlane.f32.xlu0 %v1080
  %v1082 = vpop.xlane.xlu0 %1081
  %v1083 = vsel %vm406, %v960, 0.0
  %1084 = vadd.xlane.f32.xlu0 %v1083
  %v1085 = vpop.xlane.xlu0 %1084
  %v1086 = vsel %vm406, %v961, 0.0
  %1087 = vadd.xlane.f32.xlu0 %v1086
  %v1088 = vpop.xlane.xlu0 %1087
  %v1089 = vsel %vm406, %v962, 0.0
  %1090 = vadd.xlane.f32.xlu0 %v1089
  %v1091 = vpop.xlane.xlu0 %1090
  %v1092 = vsel %vm406, %v963, 0.0
  %1093 = vadd.xlane.f32.xlu0 %v1092
  %v1094 = vpop.xlane.xlu0 %1093
  %v1095 = vsel %vm406, %v964, 0.0
  %1096 = vadd.xlane.f32.xlu0 %v1095
  %v1097 = vpop.xlane.xlu0 %1096
  %v1098 = vsel %vm406, %v965, 0.0
  %1099 = vadd.xlane.f32.xlu0 %v1098
  %v1100 = vpop.xlane.xlu0 %1099
  %v1101 = vsel %vm406, %v966, 0.0
  %1102 = vadd.xlane.f32.xlu0 %v1101
  %v1103 = vpop.xlane.xlu0 %1102
  %v1104 = vsel %vm406, %v967, 0.0
  %1105 = vadd.xlane.f32.xlu0 %v1104
  %v1106 = vpop.xlane.xlu0 %1105
  %v1107 = vsel %vm406, %v968, 0.0
  %1108 = vadd.xlane.f32.xlu0 %v1107
  %v1109 = vpop.xlane.xlu0 %1108
  %v1110 = vsel %vm406, %v969, 0.0
  %1111 = vadd.xlane.f32.xlu0 %v1110
  %v1112 = vpop.xlane.xlu0 %1111
  %v1113 = vsel %vm435, %v970, 0.0
  %1114 = vadd.xlane.f32.xlu0 %v1113
  %v1115 = vpop.xlane.xlu0 %1114
  %v1116 = vmul.f32 %v1031, 0.0078125
  %v1117 = vmul.f32 %v1034, 0.0078125
  %v1118 = vmul.f32 %v1037, 0.0078125
  %v1119 = vmul.f32 %v1040, 0.0078125
  %v1120 = vmul.f32 %v1043, 0.0078125
  %v1121 = vmul.f32 %v1046, 0.0078125
  %v1122 = vmul.f32 %v1049, 0.0078125
  %v1123 = vmul.f32 %v1052, 0.0078125
  %v1124 = vmul.f32 %v1055, 0.0078125
  %v1125 = vmul.f32 %v1058, 0.0078125
  %v1126 = vmul.f32 %v1061, 0.0078125
  %v1127 = vmul.f32 %v1064, 0.0078125
  %v1128 = vmul.f32 %v1067, 0.0078125
  %v1129 = vmul.f32 %v1070, 0.0078125
  %v1130 = vmul.f32 %v1073, 0.0078125
  %v1131 = vmul.f32 %v1076, 0.0078125
  %v1132 = vmul.f32 %v1079, 0.0078125
  %v1133 = vmul.f32 %v1082, 0.0078125
  %v1134 = vmul.f32 %v1085, 0.0078125
  %v1135 = vmul.f32 %v1088, 0.0078125
  %v1136 = vmul.f32 %v1091, 0.0078125
  %v1137 = vmul.f32 %v1094, 0.0078125
  %v1138 = vmul.f32 %v1097, 0.0078125
  %v1139 = vmul.f32 %v1100, 0.0078125
  %v1140 = vmul.f32 %v1103, 0.0078125
  %v1141 = vmul.f32 %v1106, 0.0078125
  %v1142 = vmul.f32 %v1109, 0.0078125
  %v1143 = vmul.f32 %v1112, 0.0078125
  %v1144 = vmul.f32 %v1115, 0.0078125
  %v1145 = vsel %vm406, %v1000, 0.0
  %1146 = vadd.xlane.f32.xlu0 %v1145
  %v1147 = vpop.xlane.xlu0 %1146
  %v1148 = vsel %vm406, %v1001, 0.0
  %1149 = vadd.xlane.f32.xlu0 %v1148
  %v1150 = vpop.xlane.xlu0 %1149
  %v1151 = vsel %vm406, %v1002, 0.0
  %1152 = vadd.xlane.f32.xlu0 %v1151
  %v1153 = vpop.xlane.xlu0 %1152
  %v1154 = vsel %vm406, %v1003, 0.0
  %1155 = vadd.xlane.f32.xlu0 %v1154
  %v1156 = vpop.xlane.xlu0 %1155
  %v1157 = vsel %vm406, %v1004, 0.0
  %1158 = vadd.xlane.f32.xlu0 %v1157
  %v1159 = vpop.xlane.xlu0 %1158
  %v1160 = vsel %vm406, %v1005, 0.0
  %1161 = vadd.xlane.f32.xlu0 %v1160
  %v1162 = vpop.xlane.xlu0 %1161
  %v1163 = vsel %vm406, %v1006, 0.0
  %1164 = vadd.xlane.f32.xlu0 %v1163
  %v1165 = vpop.xlane.xlu0 %1164
  %v1166 = vsel %vm406, %v1007, 0.0
  %1167 = vadd.xlane.f32.xlu0 %v1166
  %v1168 = vpop.xlane.xlu0 %1167
  %v1169 = vsel %vm406, %v1008, 0.0
  %1170 = vadd.xlane.f32.xlu0 %v1169
  %v1171 = vpop.xlane.xlu0 %1170
  %v1172 = vsel %vm406, %v1009, 0.0
  %1173 = vadd.xlane.f32.xlu0 %v1172
  %v1174 = vpop.xlane.xlu0 %1173
  %v1175 = vsel %vm406, %v1010, 0.0
  %1176 = vadd.xlane.f32.xlu0 %v1175
  %v1177 = vpop.xlane.xlu0 %1176
  %v1178 = vsel %vm406, %v1011, 0.0
  %1179 = vadd.xlane.f32.xlu0 %v1178
  %v1180 = vpop.xlane.xlu0 %1179
  %v1181 = vsel %vm406, %v1012, 0.0
  %1182 = vadd.xlane.f32.xlu0 %v1181
  %v1183 = vpop.xlane.xlu0 %1182
  %v1184 = vsel %vm406, %v1013, 0.0
  %1185 = vadd.xlane.f32.xlu0 %v1184
  %v1186 = vpop.xlane.xlu0 %1185
  %v1187 = vsel %vm406, %v1014, 0.0
  %1188 = vadd.xlane.f32.xlu0 %v1187
  %v1189 = vpop.xlane.xlu0 %1188
  %v1190 = vsel %vm406, %v1015, 0.0
  %1191 = vadd.xlane.f32.xlu0 %v1190
  %v1192 = vpop.xlane.xlu0 %1191
  %v1193 = vsel %vm406, %v1016, 0.0
  %1194 = vadd.xlane.f32.xlu0 %v1193
  %v1195 = vpop.xlane.xlu0 %1194
  %v1196 = vsel %vm406, %v1017, 0.0
  %1197 = vadd.xlane.f32.xlu0 %v1196
  %v1198 = vpop.xlane.xlu0 %1197
  %v1199 = vsel %vm406, %v1018, 0.0
  %1200 = vadd.xlane.f32.xlu0 %v1199
  %v1201 = vpop.xlane.xlu0 %1200
  %v1202 = vsel %vm406, %v1019, 0.0
  %1203 = vadd.xlane.f32.xlu0 %v1202
  %v1204 = vpop.xlane.xlu0 %1203
  %v1205 = vsel %vm406, %v1020, 0.0
  %1206 = vadd.xlane.f32.xlu0 %v1205
  %v1207 = vpop.xlane.xlu0 %1206
  %v1208 = vsel %vm406, %v1021, 0.0
  %1209 = vadd.xlane.f32.xlu0 %v1208
  %v1210 = vpop.xlane.xlu0 %1209
  %v1211 = vsel %vm406, %v1022, 0.0
  %1212 = vadd.xlane.f32.xlu0 %v1211
  %v1213 = vpop.xlane.xlu0 %1212
  %v1214 = vsel %vm406, %v1023, 0.0
  %1215 = vadd.xlane.f32.xlu0 %v1214
  %v1216 = vpop.xlane.xlu0 %1215
  %v1217 = vsel %vm406, %v1024, 0.0
  %1218 = vadd.xlane.f32.xlu0 %v1217
  %v1219 = vpop.xlane.xlu0 %1218
  %v1220 = vsel %vm406, %v1025, 0.0
  %1221 = vadd.xlane.f32.xlu0 %v1220
  %v1222 = vpop.xlane.xlu0 %1221
  %v1223 = vsel %vm406, %v1026, 0.0
  %1224 = vadd.xlane.f32.xlu0 %v1223
  %v1225 = vpop.xlane.xlu0 %1224
  %v1226 = vsel %vm406, %v1027, 0.0
  %1227 = vadd.xlane.f32.xlu0 %v1226
  %v1228 = vpop.xlane.xlu0 %1227
  %v1229 = vsel %vm435, %v1028, 0.0
  %1230 = vadd.xlane.f32.xlu0 %v1229
  %v1231 = vpop.xlane.xlu0 %1230
  %v1232 = vmul.f32 %v1147, 0.0078125
  %v1233 = vmul.f32 %v1150, 0.0078125
  %v1234 = vmul.f32 %v1153, 0.0078125
  %v1235 = vmul.f32 %v1156, 0.0078125
  %v1236 = vmul.f32 %v1159, 0.0078125
  %v1237 = vmul.f32 %v1162, 0.0078125
  %v1238 = vmul.f32 %v1165, 0.0078125
  %v1239 = vmul.f32 %v1168, 0.0078125
  %v1240 = vmul.f32 %v1171, 0.0078125
  %v1241 = vmul.f32 %v1174, 0.0078125
  %v1242 = vmul.f32 %v1177, 0.0078125
  %v1243 = vmul.f32 %v1180, 0.0078125
  %v1244 = vmul.f32 %v1183, 0.0078125
  %v1245 = vmul.f32 %v1186, 0.0078125
  %v1246 = vmul.f32 %v1189, 0.0078125
  %v1247 = vmul.f32 %v1192, 0.0078125
  %v1248 = vmul.f32 %v1195, 0.0078125
  %v1249 = vmul.f32 %v1198, 0.0078125
  %v1250 = vmul.f32 %v1201, 0.0078125
  %v1251 = vmul.f32 %v1204, 0.0078125
  %v1252 = vmul.f32 %v1207, 0.0078125
  %v1253 = vmul.f32 %v1210, 0.0078125
  %v1254 = vmul.f32 %v1213, 0.0078125
  %v1255 = vmul.f32 %v1216, 0.0078125
  %v1256 = vmul.f32 %v1219, 0.0078125
  %v1257 = vmul.f32 %v1222, 0.0078125
  %v1258 = vmul.f32 %v1225, 0.0078125
  %v1259 = vmul.f32 %v1228, 0.0078125
  %v1260 = vmul.f32 %v1231, 0.0078125
  %v1261 = vmul.f32 %v1116, %v1116
  %v1262 = vmul.f32 %v1117, %v1117
  %v1263 = vmul.f32 %v1118, %v1118
  %v1264 = vmul.f32 %v1119, %v1119
  %v1265 = vmul.f32 %v1120, %v1120
  %v1266 = vmul.f32 %v1121, %v1121
  %v1267 = vmul.f32 %v1122, %v1122
  %v1268 = vmul.f32 %v1123, %v1123
  %v1269 = vmul.f32 %v1124, %v1124
  %v1270 = vmul.f32 %v1125, %v1125
  %v1271 = vmul.f32 %v1126, %v1126
  %v1272 = vmul.f32 %v1127, %v1127
  %v1273 = vmul.f32 %v1128, %v1128
  %v1274 = vmul.f32 %v1129, %v1129
  %v1275 = vmul.f32 %v1130, %v1130
  %v1276 = vmul.f32 %v1131, %v1131
  %v1277 = vmul.f32 %v1132, %v1132
  %v1278 = vmul.f32 %v1133, %v1133
  %v1279 = vmul.f32 %v1134, %v1134
  %v1280 = vmul.f32 %v1135, %v1135
  %v1281 = vmul.f32 %v1136, %v1136
  %v1282 = vmul.f32 %v1137, %v1137
  %v1283 = vmul.f32 %v1138, %v1138
  %v1284 = vmul.f32 %v1139, %v1139
  %v1285 = vmul.f32 %v1140, %v1140
  %v1286 = vmul.f32 %v1141, %v1141
  %v1287 = vmul.f32 %v1142, %v1142
  %v1288 = vmul.f32 %v1143, %v1143
  %v1289 = vmul.f32 %v1144, %v1144
  %v1290 = vsub.f32 %v1232, %v1261
  %v1291 = vsub.f32 %v1233, %v1262
  %v1292 = vsub.f32 %v1234, %v1263
  %v1293 = vsub.f32 %v1235, %v1264
  %v1294 = vsub.f32 %v1236, %v1265
  %v1295 = vsub.f32 %v1237, %v1266
  %v1296 = vsub.f32 %v1238, %v1267
  %v1297 = vsub.f32 %v1239, %v1268
  %v1298 = vsub.f32 %v1240, %v1269
  %v1299 = vsub.f32 %v1241, %v1270
  %v1300 = vsub.f32 %v1242, %v1271
  %v1301 = vsub.f32 %v1243, %v1272
  %v1302 = vsub.f32 %v1244, %v1273
  %v1303 = vsub.f32 %v1245, %v1274
  %v1304 = vsub.f32 %v1246, %v1275
  %v1305 = vsub.f32 %v1247, %v1276
  %v1306 = vsub.f32 %v1248, %v1277
  %v1307 = vsub.f32 %v1249, %v1278
  %v1308 = vsub.f32 %v1250, %v1279
  %v1309 = vsub.f32 %v1251, %v1280
  %v1310 = vsub.f32 %v1252, %v1281
  %v1311 = vsub.f32 %v1253, %v1282
  %v1312 = vsub.f32 %v1254, %v1283
  %v1313 = vsub.f32 %v1255, %v1284
  %v1314 = vsub.f32 %v1256, %v1285
  %v1315 = vsub.f32 %v1257, %v1286
  %v1316 = vsub.f32 %v1258, %v1287
  %v1317 = vsub.f32 %v1259, %v1288
  %v1318 = vsub.f32 %v1260, %v1289
  %v1319 = vmax.f32 %v1290, 0.0
  %v1320 = vmax.f32 %v1291, 0.0
  %v1321 = vmax.f32 %v1292, 0.0
  %v1322 = vmax.f32 %v1293, 0.0
  %v1323 = vmax.f32 %v1294, 0.0
  %v1324 = vmax.f32 %v1295, 0.0
  %v1325 = vmax.f32 %v1296, 0.0
  %v1326 = vmax.f32 %v1297, 0.0
  %v1327 = vmax.f32 %v1298, 0.0
  %v1328 = vmax.f32 %v1299, 0.0
  %v1329 = vmax.f32 %v1300, 0.0
  %v1330 = vmax.f32 %v1301, 0.0
  %v1331 = vmax.f32 %v1302, 0.0
  %v1332 = vmax.f32 %v1303, 0.0
  %v1333 = vmax.f32 %v1304, 0.0
  %v1334 = vmax.f32 %v1305, 0.0
  %v1335 = vmax.f32 %v1306, 0.0
  %v1336 = vmax.f32 %v1307, 0.0
  %v1337 = vmax.f32 %v1308, 0.0
  %v1338 = vmax.f32 %v1309, 0.0
  %v1339 = vmax.f32 %v1310, 0.0
  %v1340 = vmax.f32 %v1311, 0.0
  %v1341 = vmax.f32 %v1312, 0.0
  %v1342 = vmax.f32 %v1313, 0.0
  %v1343 = vmax.f32 %v1314, 0.0
  %v1344 = vmax.f32 %v1315, 0.0
  %v1345 = vmax.f32 %v1316, 0.0
  %v1346 = vmax.f32 %v1317, 0.0
  %v1347 = vmax.f32 %v1318, 0.0
  %v1348 = vld [vmem:[%s2] sm:$0xff]
  %v1349 = vld [vmem:[%s2 + $0x8] sm:$0xff]
  %v1350 = vld [vmem:[%s2 + $0x10] sm:$0xff]
  %v1351 = vld [vmem:[%s2 + $0x18] sm:$0xff]
  %v1352 = vld [vmem:[%s2 + $0x20] sm:$0xff]
  %v1353 = vld [vmem:[%s2 + $0x28] sm:$0xff]
  %v1354 = vld [vmem:[%s2 + $0x30] sm:$0xff]
  %v1355 = vld [vmem:[%s2 + $0x38] sm:$0xff]
  %v1356 = vld [vmem:[%s2 + $0x40] sm:$0xff]
  %v1357 = vld [vmem:[%s2 + $0x48] sm:$0xff]
  %v1358 = vld [vmem:[%s2 + $0x50] sm:$0xff]
  %v1359 = vld [vmem:[%s2 + $0x58] sm:$0xff]
  %v1360 = vld [vmem:[%s2 + $0x60] sm:$0xff]
  %v1361 = vld [vmem:[%s2 + $0x68] sm:$0xff]
  %v1362 = vld [vmem:[%s2 + $0x70] sm:$0xff]
  %v1363 = vld [vmem:[%s2 + $0x78] sm:$0xff]
  %v1364 = vld [vmem:[%s2 + $0x80] sm:$0xff]
  %v1365 = vld [vmem:[%s2 + $0x88] sm:$0xff]
  %v1366 = vld [vmem:[%s2 + $0x90] sm:$0xff]
  %v1367 = vld [vmem:[%s2 + $0x98] sm:$0xff]
  %v1368 = vld [vmem:[%s2 + $0xa0] sm:$0xff]
  %v1369 = vld [vmem:[%s2 + $0xa8] sm:$0xff]
  %v1370 = vld [vmem:[%s2 + $0xb0] sm:$0xff]
  %v1371 = vld [vmem:[%s2 + $0xb8] sm:$0xff]
  %v1372 = vld [vmem:[%s2 + $0xc0] sm:$0xff]
  %v1373 = vld [vmem:[%s2 + $0xc8] sm:$0xff]
  %v1374 = vld [vmem:[%s2 + $0xd0] sm:$0xff]
  %v1375 = vld [vmem:[%s2 + $0xd8] sm:$0xff]
  %v1376 = vld [vmem:[%s2 + $0xe0] sm:$0x1]
  %v1377 = vadd.f32 %v1319, 1e-05
  %v1378 = vadd.f32 %v1320, 1e-05
  %v1379 = vadd.f32 %v1321, 1e-05
  %v1380 = vadd.f32 %v1322, 1e-05
  %v1381 = vadd.f32 %v1323, 1e-05
  %v1382 = vadd.f32 %v1324, 1e-05
  %v1383 = vadd.f32 %v1325, 1e-05
  %v1384 = vadd.f32 %v1326, 1e-05
  %v1385 = vadd.f32 %v1327, 1e-05
  %v1386 = vadd.f32 %v1328, 1e-05
  %v1387 = vadd.f32 %v1329, 1e-05
  %v1388 = vadd.f32 %v1330, 1e-05
  %v1389 = vadd.f32 %v1331, 1e-05
  %v1390 = vadd.f32 %v1332, 1e-05
  %v1391 = vadd.f32 %v1333, 1e-05
  %v1392 = vadd.f32 %v1334, 1e-05
  %v1393 = vadd.f32 %v1335, 1e-05
  %v1394 = vadd.f32 %v1336, 1e-05
  %v1395 = vadd.f32 %v1337, 1e-05
  %v1396 = vadd.f32 %v1338, 1e-05
  %v1397 = vadd.f32 %v1339, 1e-05
  %v1398 = vadd.f32 %v1340, 1e-05
  %v1399 = vadd.f32 %v1341, 1e-05
  %v1400 = vadd.f32 %v1342, 1e-05
  %v1401 = vadd.f32 %v1343, 1e-05
  %v1402 = vadd.f32 %v1344, 1e-05
  %v1403 = vadd.f32 %v1345, 1e-05
  %v1404 = vadd.f32 %v1346, 1e-05
  %v1405 = vadd.f32 %v1347, 1e-05
  %v1406 = vrsqrt.pop %v1377
  %v1407 = vrsqrt.pop %v1378
  %v1408 = vrsqrt.pop %v1379
  %v1409 = vrsqrt.pop %v1380
  %v1410 = vrsqrt.pop %v1381
  %v1411 = vrsqrt.pop %v1382
  %v1412 = vrsqrt.pop %v1383
  %v1413 = vrsqrt.pop %v1384
  %v1414 = vrsqrt.pop %v1385
  %v1415 = vrsqrt.pop %v1386
  %v1416 = vrsqrt.pop %v1387
  %v1417 = vrsqrt.pop %v1388
  %v1418 = vrsqrt.pop %v1389
  %v1419 = vrsqrt.pop %v1390
  %v1420 = vrsqrt.pop %v1391
  %v1421 = vrsqrt.pop %v1392
  %v1422 = vrsqrt.pop %v1393
  %v1423 = vrsqrt.pop %v1394
  %v1424 = vrsqrt.pop %v1395
  %v1425 = vrsqrt.pop %v1396
  %v1426 = vrsqrt.pop %v1397
  %v1427 = vrsqrt.pop %v1398
  %v1428 = vrsqrt.pop %v1399
  %v1429 = vrsqrt.pop %v1400
  %v1430 = vrsqrt.pop %v1401
  %v1431 = vrsqrt.pop %v1402
  %v1432 = vrsqrt.pop %v1403
  %v1433 = vrsqrt.pop %v1404
  %v1434 = vrsqrt.pop %v1405
  %v1435 = vmul.f32 %v1348, %v1406
  %v1436 = vmul.f32 %v1349, %v1407
  %v1437 = vmul.f32 %v1350, %v1408
  %v1438 = vmul.f32 %v1351, %v1409
  %v1439 = vmul.f32 %v1352, %v1410
  %v1440 = vmul.f32 %v1353, %v1411
  %v1441 = vmul.f32 %v1354, %v1412
  %v1442 = vmul.f32 %v1355, %v1413
  %v1443 = vmul.f32 %v1356, %v1414
  %v1444 = vmul.f32 %v1357, %v1415
  %v1445 = vmul.f32 %v1358, %v1416
  %v1446 = vmul.f32 %v1359, %v1417
  %v1447 = vmul.f32 %v1360, %v1418
  %v1448 = vmul.f32 %v1361, %v1419
  %v1449 = vmul.f32 %v1362, %v1420
  %v1450 = vmul.f32 %v1363, %v1421
  %v1451 = vmul.f32 %v1364, %v1422
  %v1452 = vmul.f32 %v1365, %v1423
  %v1453 = vmul.f32 %v1366, %v1424
  %v1454 = vmul.f32 %v1367, %v1425
  %v1455 = vmul.f32 %v1368, %v1426
  %v1456 = vmul.f32 %v1369, %v1427
  %v1457 = vmul.f32 %v1370, %v1428
  %v1458 = vmul.f32 %v1371, %v1429
  %v1459 = vmul.f32 %v1372, %v1430
  %v1460 = vmul.f32 %v1373, %v1431
  %v1461 = vmul.f32 %v1374, %v1432
  %v1462 = vmul.f32 %v1375, %v1433
  %v1463 = vmul.f32 %v1376, %v1434
  %v1464 = vld [vmem:[%s3] sm:$0xff]
  %v1465 = vld [vmem:[%s3 + $0x8] sm:$0xff]
  %v1466 = vld [vmem:[%s3 + $0x10] sm:$0xff]
  %v1467 = vld [vmem:[%s3 + $0x18] sm:$0xff]
  %v1468 = vld [vmem:[%s3 + $0x20] sm:$0xff]
  %v1469 = vld [vmem:[%s3 + $0x28] sm:$0xff]
  %v1470 = vld [vmem:[%s3 + $0x30] sm:$0xff]
  %v1471 = vld [vmem:[%s3 + $0x38] sm:$0xff]
  %v1472 = vld [vmem:[%s3 + $0x40] sm:$0xff]
  %v1473 = vld [vmem:[%s3 + $0x48] sm:$0xff]
  %v1474 = vld [vmem:[%s3 + $0x50] sm:$0xff]
  %v1475 = vld [vmem:[%s3 + $0x58] sm:$0xff]
  %v1476 = vld [vmem:[%s3 + $0x60] sm:$0xff]
  %v1477 = vld [vmem:[%s3 + $0x68] sm:$0xff]
  %v1478 = vld [vmem:[%s3 + $0x70] sm:$0xff]
  %v1479 = vld [vmem:[%s3 + $0x78] sm:$0xff]
  %v1480 = vld [vmem:[%s3 + $0x80] sm:$0xff]
  %v1481 = vld [vmem:[%s3 + $0x88] sm:$0xff]
  %v1482 = vld [vmem:[%s3 + $0x90] sm:$0xff]
  %v1483 = vld [vmem:[%s3 + $0x98] sm:$0xff]
  %v1484 = vld [vmem:[%s3 + $0xa0] sm:$0xff]
  %v1485 = vld [vmem:[%s3 + $0xa8] sm:$0xff]
  %v1486 = vld [vmem:[%s3 + $0xb0] sm:$0xff]
  %v1487 = vld [vmem:[%s3 + $0xb8] sm:$0xff]
  %v1488 = vld [vmem:[%s3 + $0xc0] sm:$0xff]
  %v1489 = vld [vmem:[%s3 + $0xc8] sm:$0xff]
  %v1490 = vld [vmem:[%s3 + $0xd0] sm:$0xff]
  %v1491 = vld [vmem:[%s3 + $0xd8] sm:$0xff]
  %v1492 = vld [vmem:[%s3 + $0xe0] sm:$0x1]
  %v1493 = vmul.f32 %v1116, %v1435
  %v1494 = vmul.f32 %v1117, %v1436
  %v1495 = vmul.f32 %v1118, %v1437
  %v1496 = vmul.f32 %v1119, %v1438
  %v1497 = vmul.f32 %v1120, %v1439
  %v1498 = vmul.f32 %v1121, %v1440
  %v1499 = vmul.f32 %v1122, %v1441
  %v1500 = vmul.f32 %v1123, %v1442
  %v1501 = vmul.f32 %v1124, %v1443
  %v1502 = vmul.f32 %v1125, %v1444
  %v1503 = vmul.f32 %v1126, %v1445
  %v1504 = vmul.f32 %v1127, %v1446
  %v1505 = vmul.f32 %v1128, %v1447
  %v1506 = vmul.f32 %v1129, %v1448
  %v1507 = vmul.f32 %v1130, %v1449
  %v1508 = vmul.f32 %v1131, %v1450
  %v1509 = vmul.f32 %v1132, %v1451
  %v1510 = vmul.f32 %v1133, %v1452
  %v1511 = vmul.f32 %v1134, %v1453
  %v1512 = vmul.f32 %v1135, %v1454
  %v1513 = vmul.f32 %v1136, %v1455
  %v1514 = vmul.f32 %v1137, %v1456
  %v1515 = vmul.f32 %v1138, %v1457
  %v1516 = vmul.f32 %v1139, %v1458
  %v1517 = vmul.f32 %v1140, %v1459
  %v1518 = vmul.f32 %v1141, %v1460
  %v1519 = vmul.f32 %v1142, %v1461
  %v1520 = vmul.f32 %v1143, %v1462
  %v1521 = vmul.f32 %v1144, %v1463
  %v1522 = vsub.f32 %v1464, %v1493
  %v1523 = vsub.f32 %v1465, %v1494
  %v1524 = vsub.f32 %v1466, %v1495
  %v1525 = vsub.f32 %v1467, %v1496
  %v1526 = vsub.f32 %v1468, %v1497
  %v1527 = vsub.f32 %v1469, %v1498
  %v1528 = vsub.f32 %v1470, %v1499
  %v1529 = vsub.f32 %v1471, %v1500
  %v1530 = vsub.f32 %v1472, %v1501
  %v1531 = vsub.f32 %v1473, %v1502
  %v1532 = vsub.f32 %v1474, %v1503
  %v1533 = vsub.f32 %v1475, %v1504
  %v1534 = vsub.f32 %v1476, %v1505
  %v1535 = vsub.f32 %v1477, %v1506
  %v1536 = vsub.f32 %v1478, %v1507
  %v1537 = vsub.f32 %v1479, %v1508
  %v1538 = vsub.f32 %v1480, %v1509
  %v1539 = vsub.f32 %v1481, %v1510
  %v1540 = vsub.f32 %v1482, %v1511
  %v1541 = vsub.f32 %v1483, %v1512
  %v1542 = vsub.f32 %v1484, %v1513
  %v1543 = vsub.f32 %v1485, %v1514
  %v1544 = vsub.f32 %v1486, %v1515
  %v1545 = vsub.f32 %v1487, %v1516
  %v1546 = vsub.f32 %v1488, %v1517
  %v1547 = vsub.f32 %v1489, %v1518
  %v1548 = vsub.f32 %v1490, %v1519
  %v1549 = vsub.f32 %v1491, %v1520
  %v1550 = vsub.f32 %v1492, %v1521
  %v1551 = vld [vmem:[#allocation2] sm:$0xff]
  %v1552 = vld [vmem:[#allocation2 + $0x8] sm:$0xff]
  %v1553 = vld [vmem:[#allocation2 + $0x10] sm:$0xff]
  %v1554 = vld [vmem:[#allocation2 + $0x18] sm:$0xff]
  %v1555 = vld [vmem:[#allocation2 + $0x20] sm:$0xff]
  %v1556 = vld [vmem:[#allocation2 + $0x28] sm:$0xff]
  %v1557 = vld [vmem:[#allocation2 + $0x30] sm:$0xff]
  %v1558 = vld [vmem:[#allocation2 + $0x38] sm:$0xff]
  %v1559 = vld [vmem:[#allocation2 + $0x40] sm:$0xff]
  %v1560 = vld [vmem:[#allocation2 + $0x48] sm:$0xff]
  %v1561 = vld [vmem:[#allocation2 + $0x50] sm:$0xff]
  %v1562 = vld [vmem:[#allocation2 + $0x58] sm:$0xff]
  %v1563 = vld [vmem:[#allocation2 + $0x60] sm:$0xff]
  %v1564 = vld [vmem:[#allocation2 + $0x68] sm:$0xff]
  %v1565 = vld [vmem:[#allocation2 + $0x70] sm:$0xff]
  %v1566 = vld [vmem:[#allocation2 + $0x78] sm:$0xff]
  %v1567 = vld [vmem:[#allocation2 + $0x80] sm:$0xff]
  %v1568 = vld [vmem:[#allocation2 + $0x88] sm:$0xff]
  %v1569 = vld [vmem:[#allocation2 + $0x90] sm:$0xff]
  %v1570 = vld [vmem:[#allocation2 + $0x98] sm:$0xff]
  %v1571 = vld [vmem:[#allocation2 + $0xa0] sm:$0xff]
  %v1572 = vld [vmem:[#allocation2 + $0xa8] sm:$0xff]
  %v1573 = vld [vmem:[#allocation2 + $0xb0] sm:$0xff]
  %v1574 = vld [vmem:[#allocation2 + $0xb8] sm:$0xff]
  %v1575 = vld [vmem:[#allocation2 + $0xc0] sm:$0xff]
  %v1576 = vld [vmem:[#allocation2 + $0xc8] sm:$0xff]
  %v1577 = vld [vmem:[#allocation2 + $0xd0] sm:$0xff]
  %v1578 = vld [vmem:[#allocation2 + $0xd8] sm:$0xff]
  %v1579 = vld [vmem:[#allocation2 + $0xe0] sm:$0x1]
  %1581 = vset.pattern.permute.xlu0 0
  %1582 = vperm.xlu0 %1581, %v1435
  %v1583 = vpop.permute.xlu0 %1582
  %1586 = vset.pattern.permute.xlu0 0
  %1587 = vperm.xlu0 %1586, %v1436
  %v1588 = vpop.permute.xlu0 %1587
  %1591 = vset.pattern.permute.xlu0 0
  %1592 = vperm.xlu0 %1591, %v1437
  %v1593 = vpop.permute.xlu0 %1592
  %1596 = vset.pattern.permute.xlu0 0
  %1597 = vperm.xlu0 %1596, %v1438
  %v1598 = vpop.permute.xlu0 %1597
  %1601 = vset.pattern.permute.xlu0 0
  %1602 = vperm.xlu0 %1601, %v1439
  %v1603 = vpop.permute.xlu0 %1602
  %1606 = vset.pattern.permute.xlu0 0
  %1607 = vperm.xlu0 %1606, %v1440
  %v1608 = vpop.permute.xlu0 %1607
  %1611 = vset.pattern.permute.xlu0 0
  %1612 = vperm.xlu0 %1611, %v1441
  %v1613 = vpop.permute.xlu0 %1612
  %1616 = vset.pattern.permute.xlu0 0
  %1617 = vperm.xlu0 %1616, %v1442
  %v1618 = vpop.permute.xlu0 %1617
  %1621 = vset.pattern.permute.xlu0 0
  %1622 = vperm.xlu0 %1621, %v1443
  %v1623 = vpop.permute.xlu0 %1622
  %1626 = vset.pattern.permute.xlu0 0
  %1627 = vperm.xlu0 %1626, %v1444
  %v1628 = vpop.permute.xlu0 %1627
  %1631 = vset.pattern.permute.xlu0 0
  %1632 = vperm.xlu0 %1631, %v1445
  %v1633 = vpop.permute.xlu0 %1632
  %1636 = vset.pattern.permute.xlu0 0
  %1637 = vperm.xlu0 %1636, %v1446
  %v1638 = vpop.permute.xlu0 %1637
  %1641 = vset.pattern.permute.xlu0 0
  %1642 = vperm.xlu0 %1641, %v1447
  %v1643 = vpop.permute.xlu0 %1642
  %1646 = vset.pattern.permute.xlu0 0
  %1647 = vperm.xlu0 %1646, %v1448
  %v1648 = vpop.permute.xlu0 %1647
  %1651 = vset.pattern.permute.xlu0 0
  %1652 = vperm.xlu0 %1651, %v1449
  %v1653 = vpop.permute.xlu0 %1652
  %1656 = vset.pattern.permute.xlu0 0
  %1657 = vperm.xlu0 %1656, %v1450
  %v1658 = vpop.permute.xlu0 %1657
  %1661 = vset.pattern.permute.xlu0 0
  %1662 = vperm.xlu0 %1661, %v1451
  %v1663 = vpop.permute.xlu0 %1662
  %1666 = vset.pattern.permute.xlu0 0
  %1667 = vperm.xlu0 %1666, %v1452
  %v1668 = vpop.permute.xlu0 %1667
  %1671 = vset.pattern.permute.xlu0 0
  %1672 = vperm.xlu0 %1671, %v1453
  %v1673 = vpop.permute.xlu0 %1672
  %1676 = vset.pattern.permute.xlu0 0
  %1677 = vperm.xlu0 %1676, %v1454
  %v1678 = vpop.permute.xlu0 %1677
  %1681 = vset.pattern.permute.xlu0 0
  %1682 = vperm.xlu0 %1681, %v1455
  %v1683 = vpop.permute.xlu0 %1682
  %1686 = vset.pattern.permute.xlu0 0
  %1687 = vperm.xlu0 %1686, %v1456
  %v1688 = vpop.permute.xlu0 %1687
  %1691 = vset.pattern.permute.xlu0 0
  %1692 = vperm.xlu0 %1691, %v1457
  %v1693 = vpop.permute.xlu0 %1692
  %1696 = vset.pattern.permute.xlu0 0
  %1697 = vperm.xlu0 %1696, %v1458
  %v1698 = vpop.permute.xlu0 %1697
  %1701 = vset.pattern.permute.xlu0 0
  %1702 = vperm.xlu0 %1701, %v1459
  %v1703 = vpop.permute.xlu0 %1702
  %1706 = vset.pattern.permute.xlu0 0
  %1707 = vperm.xlu0 %1706, %v1460
  %v1708 = vpop.permute.xlu0 %1707
  %1711 = vset.pattern.permute.xlu0 0
  %1712 = vperm.xlu0 %1711, %v1461
  %v1713 = vpop.permute.xlu0 %1712
  %1716 = vset.pattern.permute.xlu0 0
  %1717 = vperm.xlu0 %1716, %v1462
  %v1718 = vpop.permute.xlu0 %1717
  %1721 = vset.pattern.permute.xlu0 0
  %1722 = vperm.xlu0 %1721, %v1463
  %v1723 = vpop.permute.xlu0 %1722
  %v1725 = vmul.f32 %v1551, %v1583
  %v1726 = vmul.f32 %v1552, %v1588
  %v1727 = vmul.f32 %v1553, %v1593
  %v1728 = vmul.f32 %v1554, %v1598
  %v1729 = vmul.f32 %v1555, %v1603
  %v1730 = vmul.f32 %v1556, %v1608
  %v1731 = vmul.f32 %v1557, %v1613
  %v1732 = vmul.f32 %v1558, %v1618
  %v1733 = vmul.f32 %v1559, %v1623
  %v1734 = vmul.f32 %v1560, %v1628
  %v1735 = vmul.f32 %v1561, %v1633
  %v1736 = vmul.f32 %v1562, %v1638
  %v1737 = vmul.f32 %v1563, %v1643
  %v1738 = vmul.f32 %v1564, %v1648
  %v1739 = vmul.f32 %v1565, %v1653
  %v1740 = vmul.f32 %v1566, %v1658
  %v1741 = vmul.f32 %v1567, %v1663
  %v1742 = vmul.f32 %v1568, %v1668
  %v1743 = vmul.f32 %v1569, %v1673
  %v1744 = vmul.f32 %v1570, %v1678
  %v1745 = vmul.f32 %v1571, %v1683
  %v1746 = vmul.f32 %v1572, %v1688
  %v1747 = vmul.f32 %v1573, %v1693
  %v1748 = vmul.f32 %v1574, %v1698
  %v1749 = vmul.f32 %v1575, %v1703
  %v1750 = vmul.f32 %v1576, %v1708
  %v1751 = vmul.f32 %v1577, %v1713
  %v1752 = vmul.f32 %v1578, %v1718
  %v1753 = vmul.f32 %v1579, %v1723
  %1755 = vset.pattern.permute.xlu0 0
  %1756 = vperm.xlu0 %1755, %v1522
  %v1757 = vpop.permute.xlu0 %1756
  %1760 = vset.pattern.permute.xlu0 0
  %1761 = vperm.xlu0 %1760, %v1523
  %v1762 = vpop.permute.xlu0 %1761
  %1765 = vset.pattern.permute.xlu0 0
  %1766 = vperm.xlu0 %1765, %v1524
  %v1767 = vpop.permute.xlu0 %1766
  %1770 = vset.pattern.permute.xlu0 0
  %1771 = vperm.xlu0 %1770, %v1525
  %v1772 = vpop.permute.xlu0 %1771
  %1775 = vset.pattern.permute.xlu0 0
  %1776 = vperm.xlu0 %1775, %v1526
  %v1777 = vpop.permute.xlu0 %1776
  %1780 = vset.pattern.permute.xlu0 0
  %1781 = vperm.xlu0 %1780, %v1527
  %v1782 = vpop.permute.xlu0 %1781
  %1785 = vset.pattern.permute.xlu0 0
  %1786 = vperm.xlu0 %1785, %v1528
  %v1787 = vpop.permute.xlu0 %1786
  %1790 = vset.pattern.permute.xlu0 0
  %1791 = vperm.xlu0 %1790, %v1529
  %v1792 = vpop.permute.xlu0 %1791
  %1795 = vset.pattern.permute.xlu0 0
  %1796 = vperm.xlu0 %1795, %v1530
  %v1797 = vpop.permute.xlu0 %1796
  %1800 = vset.pattern.permute.xlu0 0
  %1801 = vperm.xlu0 %1800, %v1531
  %v1802 = vpop.permute.xlu0 %1801
  %1805 = vset.pattern.permute.xlu0 0
  %1806 = vperm.xlu0 %1805, %v1532
  %v1807 = vpop.permute.xlu0 %1806
  %1810 = vset.pattern.permute.xlu0 0
  %1811 = vperm.xlu0 %1810, %v1533
  %v1812 = vpop.permute.xlu0 %1811
  %1815 = vset.pattern.permute.xlu0 0
  %1816 = vperm.xlu0 %1815, %v1534
  %v1817 = vpop.permute.xlu0 %1816
  %1820 = vset.pattern.permute.xlu0 0
  %1821 = vperm.xlu0 %1820, %v1535
  %v1822 = vpop.permute.xlu0 %1821
  %1825 = vset.pattern.permute.xlu0 0
  %1826 = vperm.xlu0 %1825, %v1536
  %v1827 = vpop.permute.xlu0 %1826
  %1830 = vset.pattern.permute.xlu0 0
  %1831 = vperm.xlu0 %1830, %v1537
  %v1832 = vpop.permute.xlu0 %1831
  %1835 = vset.pattern.permute.xlu0 0
  %1836 = vperm.xlu0 %1835, %v1538
  %v1837 = vpop.permute.xlu0 %1836
  %1840 = vset.pattern.permute.xlu0 0
  %1841 = vperm.xlu0 %1840, %v1539
  %v1842 = vpop.permute.xlu0 %1841
  %1845 = vset.pattern.permute.xlu0 0
  %1846 = vperm.xlu0 %1845, %v1540
  %v1847 = vpop.permute.xlu0 %1846
  %1850 = vset.pattern.permute.xlu0 0
  %1851 = vperm.xlu0 %1850, %v1541
  %v1852 = vpop.permute.xlu0 %1851
  %1855 = vset.pattern.permute.xlu0 0
  %1856 = vperm.xlu0 %1855, %v1542
  %v1857 = vpop.permute.xlu0 %1856
  %1860 = vset.pattern.permute.xlu0 0
  %1861 = vperm.xlu0 %1860, %v1543
  %v1862 = vpop.permute.xlu0 %1861
  %1865 = vset.pattern.permute.xlu0 0
  %1866 = vperm.xlu0 %1865, %v1544
  %v1867 = vpop.permute.xlu0 %1866
  %1870 = vset.pattern.permute.xlu0 0
  %1871 = vperm.xlu0 %1870, %v1545
  %v1872 = vpop.permute.xlu0 %1871
  %1875 = vset.pattern.permute.xlu0 0
  %1876 = vperm.xlu0 %1875, %v1546
  %v1877 = vpop.permute.xlu0 %1876
  %1880 = vset.pattern.permute.xlu0 0
  %1881 = vperm.xlu0 %1880, %v1547
  %v1882 = vpop.permute.xlu0 %1881
  %1885 = vset.pattern.permute.xlu0 0
  %1886 = vperm.xlu0 %1885, %v1548
  %v1887 = vpop.permute.xlu0 %1886
  %1890 = vset.pattern.permute.xlu0 0
  %1891 = vperm.xlu0 %1890, %v1549
  %v1892 = vpop.permute.xlu0 %1891
  %1895 = vset.pattern.permute.xlu0 0
  %1896 = vperm.xlu0 %1895, %v1550
  %v1897 = vpop.permute.xlu0 %1896
  %v1899 = vadd.f32 %v1725, %v1757
  %v1900 = vadd.f32 %v1726, %v1762
  %v1901 = vadd.f32 %v1727, %v1767
  %v1902 = vadd.f32 %v1728, %v1772
  %v1903 = vadd.f32 %v1729, %v1777
  %v1904 = vadd.f32 %v1730, %v1782
  %v1905 = vadd.f32 %v1731, %v1787
  %v1906 = vadd.f32 %v1732, %v1792
  %v1907 = vadd.f32 %v1733, %v1797
  %v1908 = vadd.f32 %v1734, %v1802
  %v1909 = vadd.f32 %v1735, %v1807
  %v1910 = vadd.f32 %v1736, %v1812
  %v1911 = vadd.f32 %v1737, %v1817
  %v1912 = vadd.f32 %v1738, %v1822
  %v1913 = vadd.f32 %v1739, %v1827
  %v1914 = vadd.f32 %v1740, %v1832
  %v1915 = vadd.f32 %v1741, %v1837
  %v1916 = vadd.f32 %v1742, %v1842
  %v1917 = vadd.f32 %v1743, %v1847
  %v1918 = vadd.f32 %v1744, %v1852
  %v1919 = vadd.f32 %v1745, %v1857
  %v1920 = vadd.f32 %v1746, %v1862
  %v1921 = vadd.f32 %v1747, %v1867
  %v1922 = vadd.f32 %v1748, %v1872
  %v1923 = vadd.f32 %v1749, %v1877
  %v1924 = vadd.f32 %v1750, %v1882
  %v1925 = vadd.f32 %v1751, %v1887
  %v1926 = vadd.f32 %v1752, %v1892
  %v1927 = vadd.f32 %v1753, %v1897
  %v1928 = vmax.f32 %v1899, 0.0
  %v1929 = vmax.f32 %v1900, 0.0
  %v1930 = vmax.f32 %v1901, 0.0
  %v1931 = vmax.f32 %v1902, 0.0
  %v1932 = vmax.f32 %v1903, 0.0
  %v1933 = vmax.f32 %v1904, 0.0
  %v1934 = vmax.f32 %v1905, 0.0
  %v1935 = vmax.f32 %v1906, 0.0
  %v1936 = vmax.f32 %v1907, 0.0
  %v1937 = vmax.f32 %v1908, 0.0
  %v1938 = vmax.f32 %v1909, 0.0
  %v1939 = vmax.f32 %v1910, 0.0
  %v1940 = vmax.f32 %v1911, 0.0
  %v1941 = vmax.f32 %v1912, 0.0
  %v1942 = vmax.f32 %v1913, 0.0
  %v1943 = vmax.f32 %v1914, 0.0
  %v1944 = vmax.f32 %v1915, 0.0
  %v1945 = vmax.f32 %v1916, 0.0
  %v1946 = vmax.f32 %v1917, 0.0
  %v1947 = vmax.f32 %v1918, 0.0
  %v1948 = vmax.f32 %v1919, 0.0
  %v1949 = vmax.f32 %v1920, 0.0
  %v1950 = vmax.f32 %v1921, 0.0
  %v1951 = vmax.f32 %v1922, 0.0
  %v1952 = vmax.f32 %v1923, 0.0
  %v1953 = vmax.f32 %v1924, 0.0
  %v1954 = vmax.f32 %v1925, 0.0
  %v1955 = vmax.f32 %v1926, 0.0
  %v1956 = vmax.f32 %v1927, 0.0
  %1957 = vst.msk [vmem:[%s4] sm:$0xff] %vm406, %v1928
  %1958 = vst.msk [vmem:[%s4 + $0x8] sm:$0xff] %vm406, %v1929
  %1959 = vst.msk [vmem:[%s4 + $0x10] sm:$0xff] %vm406, %v1930
  %1960 = vst.msk [vmem:[%s4 + $0x18] sm:$0xff] %vm406, %v1931
  %1961 = vst.msk [vmem:[%s4 + $0x20] sm:$0xff] %vm406, %v1932
  %1962 = vst.msk [vmem:[%s4 + $0x28] sm:$0xff] %vm406, %v1933
  %1963 = vst.msk [vmem:[%s4 + $0x30] sm:$0xff] %vm406, %v1934
  %1964 = vst.msk [vmem:[%s4 + $0x38] sm:$0xff] %vm406, %v1935
  %1965 = vst.msk [vmem:[%s4 + $0x40] sm:$0xff] %vm406, %v1936
  %1966 = vst.msk [vmem:[%s4 + $0x48] sm:$0xff] %vm406, %v1937
  %1967 = vst.msk [vmem:[%s4 + $0x50] sm:$0xff] %vm406, %v1938
  %1968 = vst.msk [vmem:[%s4 + $0x58] sm:$0xff] %vm406, %v1939
  %1969 = vst.msk [vmem:[%s4 + $0x60] sm:$0xff] %vm406, %v1940
  %1970 = vst.msk [vmem:[%s4 + $0x68] sm:$0xff] %vm406, %v1941
  %1971 = vst.msk [vmem:[%s4 + $0x70] sm:$0xff] %vm406, %v1942
  %1972 = vst.msk [vmem:[%s4 + $0x78] sm:$0xff] %vm406, %v1943
  %1973 = vst.msk [vmem:[%s4 + $0x80] sm:$0xff] %vm406, %v1944
  %1974 = vst.msk [vmem:[%s4 + $0x88] sm:$0xff] %vm406, %v1945
  %1975 = vst.msk [vmem:[%s4 + $0x90] sm:$0xff] %vm406, %v1946
  %1976 = vst.msk [vmem:[%s4 + $0x98] sm:$0xff] %vm406, %v1947
  %1977 = vst.msk [vmem:[%s4 + $0xa0] sm:$0xff] %vm406, %v1948
  %1978 = vst.msk [vmem:[%s4 + $0xa8] sm:$0xff] %vm406, %v1949
  %1979 = vst.msk [vmem:[%s4 + $0xb0] sm:$0xff] %vm406, %v1950
  %1980 = vst.msk [vmem:[%s4 + $0xb8] sm:$0xff] %vm406, %v1951
  %1981 = vst.msk [vmem:[%s4 + $0xc0] sm:$0xff] %vm406, %v1952
  %1982 = vst.msk [vmem:[%s4 + $0xc8] sm:$0xff] %vm406, %v1953
  %1983 = vst.msk [vmem:[%s4 + $0xd0] sm:$0xff] %vm406, %v1954
  %1984 = vst.msk [vmem:[%s4 + $0xd8] sm:$0xff] %vm406, %v1955
  %1985 = vst.msk [vmem:[%s4 + $0xe0] sm:$0x1] %vm435, %v1956
  %v1986 = vld [vmem:[%s912] sm:$0xff]
  %v1987 = vld [vmem:[%s912 + $0x8] sm:$0xff]
  %v1988 = vld [vmem:[%s912 + $0x10] sm:$0xff]
  %v1989 = vld [vmem:[%s912 + $0x18] sm:$0xff]
  %v1990 = vld [vmem:[%s912 + $0x20] sm:$0xff]
  %v1991 = vld [vmem:[%s912 + $0x28] sm:$0xff]
  %v1992 = vld [vmem:[%s912 + $0x30] sm:$0xff]
  %v1993 = vld [vmem:[%s912 + $0x38] sm:$0xff]
  %v1994 = vld [vmem:[%s912 + $0x40] sm:$0xff]
  %v1995 = vld [vmem:[%s912 + $0x48] sm:$0xff]
  %v1996 = vld [vmem:[%s912 + $0x50] sm:$0xff]
  %v1997 = vld [vmem:[%s912 + $0x58] sm:$0xff]
  %v1998 = vld [vmem:[%s912 + $0x60] sm:$0xff]
  %v1999 = vld [vmem:[%s912 + $0x68] sm:$0xff]
  %v2000 = vld [vmem:[%s912 + $0x70] sm:$0xff]
  %v2001 = vld [vmem:[%s912 + $0x78] sm:$0xff]
  %v2002 = vld [vmem:[%s912 + $0x80] sm:$0xff]
  %v2003 = vld [vmem:[%s912 + $0x88] sm:$0xff]
  %v2004 = vld [vmem:[%s912 + $0x90] sm:$0xff]
  %v2005 = vld [vmem:[%s912 + $0x98] sm:$0xff]
  %v2006 = vld [vmem:[%s912 + $0xa0] sm:$0xff]
  %v2007 = vld [vmem:[%s912 + $0xa8] sm:$0xff]
  %v2008 = vld [vmem:[%s912 + $0xb0] sm:$0xff]
  %v2009 = vld [vmem:[%s912 + $0xb8] sm:$0xff]
  %v2010 = vld [vmem:[%s912 + $0xc0] sm:$0xff]
  %v2011 = vld [vmem:[%s912 + $0xc8] sm:$0xff]
  %v2012 = vld [vmem:[%s912 + $0xd0] sm:$0xff]
  %v2013 = vld [vmem:[%s912 + $0xd8] sm:$0xff]
  %v2014 = vld [vmem:[%s912 + $0xe0] sm:$0x1]
  %v2015 = vmul.f32 %v1986, %v1583
  %v2016 = vmul.f32 %v1987, %v1588
  %v2017 = vmul.f32 %v1988, %v1593
  %v2018 = vmul.f32 %v1989, %v1598
  %v2019 = vmul.f32 %v1990, %v1603
  %v2020 = vmul.f32 %v1991, %v1608
  %v2021 = vmul.f32 %v1992, %v1613
  %v2022 = vmul.f32 %v1993, %v1618
  %v2023 = vmul.f32 %v1994, %v1623
  %v2024 = vmul.f32 %v1995, %v1628
  %v2025 = vmul.f32 %v1996, %v1633
  %v2026 = vmul.f32 %v1997, %v1638
  %v2027 = vmul.f32 %v1998, %v1643
  %v2028 = vmul.f32 %v1999, %v1648
  %v2029 = vmul.f32 %v2000, %v1653
  %v2030 = vmul.f32 %v2001, %v1658
  %v2031 = vmul.f32 %v2002, %v1663
  %v2032 = vmul.f32 %v2003, %v1668
  %v2033 = vmul.f32 %v2004, %v1673
  %v2034 = vmul.f32 %v2005, %v1678
  %v2035 = vmul.f32 %v2006, %v1683
  %v2036 = vmul.f32 %v2007, %v1688
  %v2037 = vmul.f32 %v2008, %v1693
  %v2038 = vmul.f32 %v2009, %v1698
  %v2039 = vmul.f32 %v2010, %v1703
  %v2040 = vmul.f32 %v2011, %v1708
  %v2041 = vmul.f32 %v2012, %v1713
  %v2042 = vmul.f32 %v2013, %v1718
  %v2043 = vmul.f32 %v2014, %v1723
  %v2044 = vadd.f32 %v2015, %v1757
  %v2045 = vadd.f32 %v2016, %v1762
  %v2046 = vadd.f32 %v2017, %v1767
  %v2047 = vadd.f32 %v2018, %v1772
  %v2048 = vadd.f32 %v2019, %v1777
  %v2049 = vadd.f32 %v2020, %v1782
  %v2050 = vadd.f32 %v2021, %v1787
  %v2051 = vadd.f32 %v2022, %v1792
  %v2052 = vadd.f32 %v2023, %v1797
  %v2053 = vadd.f32 %v2024, %v1802
  %v2054 = vadd.f32 %v2025, %v1807
  %v2055 = vadd.f32 %v2026, %v1812
  %v2056 = vadd.f32 %v2027, %v1817
  %v2057 = vadd.f32 %v2028, %v1822
  %v2058 = vadd.f32 %v2029, %v1827
  %v2059 = vadd.f32 %v2030, %v1832
  %v2060 = vadd.f32 %v2031, %v1837
  %v2061 = vadd.f32 %v2032, %v1842
  %v2062 = vadd.f32 %v2033, %v1847
  %v2063 = vadd.f32 %v2034, %v1852
  %v2064 = vadd.f32 %v2035, %v1857
  %v2065 = vadd.f32 %v2036, %v1862
  %v2066 = vadd.f32 %v2037, %v1867
  %v2067 = vadd.f32 %v2038, %v1872
  %v2068 = vadd.f32 %v2039, %v1877
  %v2069 = vadd.f32 %v2040, %v1882
  %v2070 = vadd.f32 %v2041, %v1887
  %v2071 = vadd.f32 %v2042, %v1892
  %v2072 = vadd.f32 %v2043, %v1897
  %v2073 = vmax.f32 %v2044, 0.0
  %v2074 = vmax.f32 %v2045, 0.0
  %v2075 = vmax.f32 %v2046, 0.0
  %v2076 = vmax.f32 %v2047, 0.0
  %v2077 = vmax.f32 %v2048, 0.0
  %v2078 = vmax.f32 %v2049, 0.0
  %v2079 = vmax.f32 %v2050, 0.0
  %v2080 = vmax.f32 %v2051, 0.0
  %v2081 = vmax.f32 %v2052, 0.0
  %v2082 = vmax.f32 %v2053, 0.0
  %v2083 = vmax.f32 %v2054, 0.0
  %v2084 = vmax.f32 %v2055, 0.0
  %v2085 = vmax.f32 %v2056, 0.0
  %v2086 = vmax.f32 %v2057, 0.0
  %v2087 = vmax.f32 %v2058, 0.0
  %v2088 = vmax.f32 %v2059, 0.0
  %v2089 = vmax.f32 %v2060, 0.0
  %v2090 = vmax.f32 %v2061, 0.0
  %v2091 = vmax.f32 %v2062, 0.0
  %v2092 = vmax.f32 %v2063, 0.0
  %v2093 = vmax.f32 %v2064, 0.0
  %v2094 = vmax.f32 %v2065, 0.0
  %v2095 = vmax.f32 %v2066, 0.0
  %v2096 = vmax.f32 %v2067, 0.0
  %v2097 = vmax.f32 %v2068, 0.0
  %v2098 = vmax.f32 %v2069, 0.0
  %v2099 = vmax.f32 %v2070, 0.0
  %v2100 = vmax.f32 %v2071, 0.0
  %v2101 = vmax.f32 %v2072, 0.0
  %s2102 = scalar_lea.vmem %s4, 232
  %2103 = vst.msk [vmem:[%s2102] sm:$0xff] %vm406, %v2073
  %2104 = vst.msk [vmem:[%s2102 + $0x8] sm:$0xff] %vm406, %v2074
  %2105 = vst.msk [vmem:[%s2102 + $0x10] sm:$0xff] %vm406, %v2075
  %2106 = vst.msk [vmem:[%s2102 + $0x18] sm:$0xff] %vm406, %v2076
  %2107 = vst.msk [vmem:[%s2102 + $0x20] sm:$0xff] %vm406, %v2077
  %2108 = vst.msk [vmem:[%s2102 + $0x28] sm:$0xff] %vm406, %v2078
  %2109 = vst.msk [vmem:[%s2102 + $0x30] sm:$0xff] %vm406, %v2079
  %2110 = vst.msk [vmem:[%s2102 + $0x38] sm:$0xff] %vm406, %v2080
  %2111 = vst.msk [vmem:[%s2102 + $0x40] sm:$0xff] %vm406, %v2081
  %2112 = vst.msk [vmem:[%s2102 + $0x48] sm:$0xff] %vm406, %v2082
  %2113 = vst.msk [vmem:[%s2102 + $0x50] sm:$0xff] %vm406, %v2083
  %2114 = vst.msk [vmem:[%s2102 + $0x58] sm:$0xff] %vm406, %v2084
  %2115 = vst.msk [vmem:[%s2102 + $0x60] sm:$0xff] %vm406, %v2085
  %2116 = vst.msk [vmem:[%s2102 + $0x68] sm:$0xff] %vm406, %v2086
  %2117 = vst.msk [vmem:[%s2102 + $0x70] sm:$0xff] %vm406, %v2087
  %2118 = vst.msk [vmem:[%s2102 + $0x78] sm:$0xff] %vm406, %v2088
  %2119 = vst.msk [vmem:[%s2102 + $0x80] sm:$0xff] %vm406, %v2089
  %2120 = vst.msk [vmem:[%s2102 + $0x88] sm:$0xff] %vm406, %v2090
  %2121 = vst.msk [vmem:[%s2102 + $0x90] sm:$0xff] %vm406, %v2091
  %2122 = vst.msk [vmem:[%s2102 + $0x98] sm:$0xff] %vm406, %v2092
  %2123 = vst.msk [vmem:[%s2102 + $0xa0] sm:$0xff] %vm406, %v2093
  %2124 = vst.msk [vmem:[%s2102 + $0xa8] sm:$0xff] %vm406, %v2094
  %2125 = vst.msk [vmem:[%s2102 + $0xb0] sm:$0xff] %vm406, %v2095
  %2126 = vst.msk [vmem:[%s2102 + $0xb8] sm:$0xff] %vm406, %v2096
  %2127 = vst.msk [vmem:[%s2102 + $0xc0] sm:$0xff] %vm406, %v2097
  %2128 = vst.msk [vmem:[%s2102 + $0xc8] sm:$0xff] %vm406, %v2098
  %2129 = vst.msk [vmem:[%s2102 + $0xd0] sm:$0xff] %vm406, %v2099
  %2130 = vst.msk [vmem:[%s2102 + $0xd8] sm:$0xff] %vm406, %v2100
  %2131 = vst.msk [vmem:[%s2102 + $0xe0] sm:$0x1] %vm435, %v2101
  // Predicated region
  $region18: #{model_forward.1} parent=0 // pred_check
    _
  $region19: #{model_forward.1} parent=0 // pred_check_branch
    %2133 = sbr.rel (0) target = $region21
  $region20: #{model_forward.1} parent=0 // pred_region
    _
  $region21: #{model_forward.1} parent=0 // pred_fallthru
    _
  // Predicated region
  $region22: #{model_forward.1} parent=0 // pred_check
    _
  $region23: #{model_forward.1} parent=0 // pred_check_branch
    %2135 = sbr.rel (0) target = $region25
  $region24: #{model_forward.1} parent=0 // pred_region
    _
  $region25: #{model_forward.1} parent=0 // pred_fallthru
    _

</llo_original>
